<compile_context>
chip_gen: v6e
topology: v6e:2x2x1
jax: 0.10.0
libtpu: 0.0.40
codegen_flags: <defaults>
</compile_context>

<pallas_src>
import functools

import jax
import jax.numpy as jnp
from jax.experimental import pallas as pl
from jax.experimental.pallas import tpu as pltpu

LANE = 128
_NEG_INF = float("-inf")
_MAX_CHUNKS_PER_STEP = 128   # cap on the fully-unrolled per-block chunk loop
_MAX_STEP_ITERS = 256        # cap on rows * chunks * channel-groups per step
_MAX_BT_FOLD = 8             # max batch rows folded into one grid step


def _vmem_capacity_bytes():
    """Physical VMEM per core; conservative 64 MiB fallback (v7x)."""
    try:
        info = pltpu.get_tpu_info()
        for name in ("vmem_capacity_bytes", "vmem_bytes", "vmem_capacity"):
            v = getattr(info, name, None)
            if v:
                return int(v)
    except Exception:
        pass
    return 64 * 2**20


def _accum_chunks(load_chunk, acc_s, acc_m, n_full, n_partial_cols):
    """Running sum/max over lane chunks of one (rows, t_hw) slab.

    load_chunk(j) -> (rows, chunk) float32 for lanes [j*chunk, (j+1)*chunk).
    n_full fully-valid chunks run the unmasked VPU add/max path; if
    n_partial_cols > 0 a single additional chunk is masked (one iota);
    chunks beyond that are never loaded.
    """
    for j in range(n_full):
        cx = load_chunk(j)
        acc_s = acc_s + cx
        acc_m = jnp.maximum(acc_m, cx)
    if n_partial_cols > 0:
        cx = load_chunk(n_full)
        lane = jax.lax.broadcasted_iota(jnp.int32, cx.shape, 1)   # one iota only
        valid = lane < n_partial_cols
        acc_s = acc_s + jnp.where(valid, cx, 0.0)
        acc_m = jnp.maximum(acc_m, jnp.where(valid, cx, _NEG_INF))
    return acc_s, acc_m


def _channel_gate_kernel(x_ref, w1t_ref, b1_ref, w2t_ref, b2_ref, out_ref,
                         *scratch, hw_total, chunk, c_blk, n_chunks,
                         single_step, bt_fold, full_chunks, partial_cols,
                         n_hw_blocks, tail_full, tail_partial):
    C = out_ref.shape[1]
    c_groups = [(c0, min(c0 + c_blk, C)) for c0 in range(0, C, c_blk)]

    def load(bt, c0, c1, j):
        # Per-chunk ref load + cast: never materializes the whole tile.
        return x_ref[bt, c0:c1, j * chunk:(j + 1) * chunk].astype(jnp.float32)

    def finalize_row(bt, tot_s, tot_m):
        avg = tot_s * (1.0 / hw_total)                         # true H*W mean
        pooled = jnp.concatenate([avg, tot_m], axis=1)         # (C, 2)
        # Fused MLP: avg and max branches share one pair of (tiny) dots.
        h = jnp.dot(w1t_ref[...], pooled, preferred_element_type=jnp.float32)
        h = jnp.maximum(h + b1_ref[...], 0.0)                  # (Cr, 2)
        att = jnp.dot(w2t_ref[...], h, preferred_element_type=jnp.float32)
        att = att + b2_ref[...]                                # (C, 2)
        gate = jax.nn.sigmoid(att[:, 0:1] + att[:, 1:2])       # (C, 1)
        out_ref[bt] = gate.astype(out_ref.dtype)

    if single_step:
        # Whole H*W fits in one block: no cross-step state; fold bt_fold batch
        # rows per grid step to amortize per-step overhead on small maps.
        for bt in range(bt_fold):
            s_parts, m_parts = [], []
            for c0, c1 in c_groups:
                zs = jnp.zeros((c1 - c0, chunk), jnp.float32)
                zm = jnp.full((c1 - c0, chunk), _NEG_INF, jnp.float32)
                a_s, a_m = _accum_chunks(
                    lambda j, bt=bt, c0=c0, c1=c1: load(bt, c0, c1, j),
                    zs, zm, full_chunks, partial_cols)
                s_parts.append(jnp.sum(a_s, axis=-1, keepdims=True))
                m_parts.append(jnp.max(a_m, axis=-1, keepdims=True))
            tot_s = s_parts[0] if len(s_parts) == 1 else jnp.concatenate(s_parts, 0)
            tot_m = m_parts[0] if len(m_parts) == 1 else jnp.concatenate(m_parts, 0)
            finalize_row(bt, tot_s, tot_m)
    else:
        sum_acc, max_acc = scratch
        s = pl.program_id(1)

        @pl.when(s == 0)
        def _init():
            sum_acc[...] = jnp.zeros_like(sum_acc)
            max_acc[...] = jnp.full_like(max_acc, _NEG_INF)

        def accum_block(n_full, n_partial):
            for c0, c1 in c_groups:
                a_s, a_m = _accum_chunks(
                    lambda j, c0=c0, c1=c1: load(0, c0, c1, j),
                    sum_acc[c0:c1, :], max_acc[c0:c1, :], n_full, n_partial)
                sum_acc[c0:c1, :] = a_s
                max_acc[c0:c1, :] = a_m

        if tail_full == n_chunks and tail_partial == 0:
            # H*W divides t_hw: every block is full, no masking anywhere.
            accum_block(n_chunks, 0)
        else:
            # Steady-state blocks: pure add/max (no iota/compare/select).
            @pl.when(s < n_hw_blocks - 1)
            def _steady():
                accum_block(n_chunks, 0)

            # Statically-known tail block: mask one chunk, skip invalid chunks.
            @pl.when(s == n_hw_blocks - 1)
            def _tail():
                accum_block(tail_full, tail_partial)

        @pl.when(s == n_hw_blocks - 1)
        def _finalize():
            # Single cross-lane (XLU) reduction, once per batch row.
            s_parts = [jnp.sum(sum_acc[c0:c1, :], axis=-1, keepdims=True)
                       for c0, c1 in c_groups]
            m_parts = [jnp.max(max_acc[c0:c1, :], axis=-1, keepdims=True)
                       for c0, c1 in c_groups]
            tot_s = s_parts[0] if len(s_parts) == 1 else jnp.concatenate(s_parts, 0)
            tot_m = m_parts[0] if len(m_parts) == 1 else jnp.concatenate(m_parts, 0)
            finalize_row(0, tot_s, tot_m)


def channel_gate(x_nchw, w1, b1, w2, b2, *, max_hw_tile=None):
    """ChannelGate.forward: returns the gate (scale) of shape (B, C, 1, 1).

    w1: (C, C//r) = Linear(C, C//r).weight.T      b1: (C//r,)
    w2: (C//r, C) = Linear(C//r, C).weight.T      b2: (C,)
    max_hw_tile: optional lane cap for the HW tile (testing override).
    """
    B, C, H, W = x_nchw.shape
    HW = H * W
    Cr = w1.shape[1]
    itemsize = jnp.dtype(x_nchw.dtype).itemsize

    x_flat = x_nchw.reshape(B, C, HW)
    w1t = jnp.asarray(w1, jnp.float32).T.reshape(Cr, C)
    w2t = jnp.asarray(w2, jnp.float32).T.reshape(C, Cr)
    b1c = jnp.asarray(b1, jnp.float32).reshape(Cr, 1)
    b2c = jnp.asarray(b2, jnp.float32).reshape(C, 1)

    # ---------------- generation-aware sizing --------------------------------
    vmem_cap = _vmem_capacity_bytes()            # 64 MiB v7x / 128 MiB v5e,v6e
    budget = int(vmem_cap * 0.75)

    # Channel sub-block and accumulator lane width: keep each accumulator at
    # <= ~8 vregs (c_blk * chunk <= 8192 f32) so sum + max + one chunk stay
    # far below the 64-vreg register file even for large C.
    c_blk = min(C, 64)
    if HW < LANE:
        chunk = HW
    else:
        chunk = min(1024, max(LANE, ((8192 // c_blk) // LANE) * LANE))
        if max_hw_tile is not None:
            chunk = min(chunk, max(LANE, (int(max_hw_tile) // LANE) * LANE))
    n_cgroups = -(-C // c_blk)

    param_bytes = (2 * Cr * C + Cr + C) * 4
    reserve = 2 * param_bytes + 2 * C * chunk * 4 + (2 << 20)
    per_buf = max((budget - reserve) // 2, C * chunk * itemsize)   # per x buffer

    if HW < LANE:
        single, t_hw, n_hw_blocks = True, HW, 1
        n_chunks, full_chunks, partial_cols = 1, 1, 0
        tail_full, tail_partial = 1, 0
    else:
        t_hw_cap = max(chunk, ((per_buf // (C * itemsize)) // chunk) * chunk)
        t_hw_cap = min(t_hw_cap, _MAX_CHUNKS_PER_STEP * chunk)
        if max_hw_tile is not None:
            t_hw_cap = min(t_hw_cap, max(chunk, (int(max_hw_tile) // chunk) * chunk))
        hw_rounded = ((HW + chunk - 1) // chunk) * chunk
        if hw_rounded <= t_hw_cap:
            single, t_hw, n_hw_blocks = True, hw_rounded, 1
            n_chunks = t_hw // chunk
            full_chunks, partial_cols = HW // chunk, HW % chunk
            tail_full, tail_partial = full_chunks, partial_cols
        else:
            single, t_hw = False, t_hw_cap
            n_hw_blocks = -(-HW // t_hw)
            n_chunks = t_hw // chunk
            full_chunks, partial_cols = n_chunks, 0
            tail_valid = HW - (n_hw_blocks - 1) * t_hw
            tail_full, tail_partial = tail_valid // chunk, tail_valid % chunk

    # Batch folding: only when the whole H*W fits in one block (small maps).
    if single:
        row_bytes = C * t_hw * itemsize
        bt_vmem = max(1, per_buf // row_bytes)
        per_row_iters = max(1, (t_hw // chunk) * n_cgroups)
        bt_iters = max(1, _MAX_STEP_ITERS // per_row_iters)
        bt_fold = int(max(1, min(B, bt_vmem, bt_iters, _MAX_BT_FOLD)))
    else:
        bt_fold = 1

    # VMEM limit from the actual buffer list (+ headroom), <= 90% physical.
    x_block_bytes = bt_fold * C * t_hw * itemsize
    out_block_bytes = bt_fold * C * itemsize
    scratch_bytes = 0 if single else 2 * C * chunk * 4
    need = (2 * x_block_bytes + 2 * param_bytes + 2 * out_block_bytes
            + scratch_bytes)
    vmem_limit = int(min(0.9 * vmem_cap, need + max(8 << 20, need // 4)))

    kernel = functools.partial(
        _channel_gate_kernel,
        hw_total=HW, chunk=chunk, c_blk=c_blk, n_chunks=n_chunks,
        single_step=single, bt_fold=bt_fold,
        full_chunks=full_chunks, partial_cols=partial_cols,
        n_hw_blocks=n_hw_blocks, tail_full=tail_full, tail_partial=tail_partial)

    grid = (-(-B // bt_fold), n_hw_blocks)
    scratch_shapes = ([] if single else
                      [pltpu.VMEM((C, chunk), jnp.float32),
                       pltpu.VMEM((C, chunk), jnp.float32)])

    def build(use_buffered_params):
        # Constant-index MLP params: single-buffered when supported.
        pkw = ({"pipeline_mode": pl.Buffered(1)} if use_buffered_params else {})
        in_specs = [
            pl.BlockSpec((bt_fold, C, t_hw), lambda b, s: (b, 0, s)),   # x stream
            pl.BlockSpec((Cr, C), lambda b, s: (0, 0), **pkw),          # w1^T
            pl.BlockSpec((Cr, 1), lambda b, s: (0, 0), **pkw),          # b1
            pl.BlockSpec((C, Cr), lambda b, s: (0, 0), **pkw),          # w2^T
            pl.BlockSpec((C, 1), lambda b, s: (0, 0), **pkw),           # b2
        ]
        return pl.pallas_call(
            kernel,
            out_shape=jax.ShapeDtypeStruct((B, C, 1), x_nchw.dtype),
            grid_spec=pltpu.PrefetchScalarGridSpec(
                num_scalar_prefetch=0,
                grid=grid,
                in_specs=in_specs,
                out_specs=pl.BlockSpec((bt_fold, C, 1), lambda b, s: (b, 0, 0)),
                scratch_shapes=scratch_shapes,
            ),
            compiler_params=pltpu.CompilerParams(
                dimension_semantics=("parallel", "arbitrary"),
                vmem_limit_bytes=vmem_limit,
            ),
        )

    try:
        scale = build(True)(x_flat, w1t, b1c, w2t, b2c)
    except Exception:
        # pipeline_mode=Buffered(1) is an optimization only; fall back to the
        # default double-buffered params if the current JAX rejects it.
        scale = build(False)(x_flat, w1t, b1c, w2t, b2c)

    return scale.reshape(B, C, 1, 1)


def channel_gate_ref(x_nchw, w1, b1, w2, b2):
    """Pure-JAX reference mirroring the PyTorch forward."""
    B, C, H, W = x_nchw.shape
    xf = x_nchw.astype(jnp.float32)
    avg_pool = xf.mean(axis=(2, 3))
    max_pool = xf.max(axis=(2, 3))

    def mlp(p):
        h = jnp.maximum(p @ w1 + b1, 0.0)
        return h @ w2 + b2

    att = mlp(avg_pool) + mlp(max_pool)
    return jax.nn.sigmoid(att).reshape(B, C, 1, 1).astype(x_nchw.dtype)


if __name__ == "__main__":
    key = jax.random.PRNGKey(0)
    ks = jax.random.split(key, 8)

    def make_params(C, r, k1, k2, k3, k4):
        Cr = C // r
        lim1 = 1.0 / float(C) ** 0.5
        lim2 = 1.0 / float(Cr) ** 0.5
        w1 = jax.random.uniform(k1, (C, Cr), jnp.float32, -lim1, lim1)
        b1 = jax.random.uniform(k2, (Cr,), jnp.float32, -lim1, lim1)
        w2 = jax.random.uniform(k3, (Cr, C), jnp.float32, -lim2, lim2)
        b2 = jax.random.uniform(k4, (C,), jnp.float32, -lim2, lim2)
        return w1, b1, w2, b2

    # Test 1: small map -> single-step, batch-folded path (B=2, C=32, 16x16).
    B, C, H, W = 2, 32, 16, 16
    w1, b1, w2, b2 = make_params(C, 16, ks[0], ks[1], ks[2], ks[3])
    x = jax.random.normal(ks[4], (B, C, H, W), dtype=jnp.float32)
    out = jax.block_until_ready(channel_gate(x, w1, b1, w2, b2))
    ref = channel_gate_ref(x, w1, b1, w2, b2)
    assert out.shape == (B, C, 1, 1)
    assert jnp.allclose(out, ref, atol=1e-5, rtol=1e-5)

    # Test 2: streaming path (HW=576, tile capped to 512): multi-chunk full
    # blocks, scratch accumulation across steps, masked + skipped tail chunks.
    x2 = jax.random.normal(ks[5], (2, C, 24, 24), dtype=jnp.float32)
    out2 = jax.block_until_ready(channel_gate(x2, w1, b1, w2, b2, max_hw_tile=512))
    ref2 = channel_gate_ref(x2, w1, b1, w2, b2)
    assert jnp.allclose(out2, ref2, atol=1e-5, rtol=1e-5)

    # Test 3: channel sub-blocking (C=128 -> two channel groups), HW=49 < 128,
    # odd batch fold (B=3).
    C3 = 128
    w1_3, b1_3, w2_3, b2_3 = make_params(C3, 16, ks[3], ks[2], ks[1], ks[0])
    x3 = jax.random.normal(ks[6], (3, C3, 7, 7), dtype=jnp.float32)
    out3 = jax.block_until_ready(channel_gate(x3, w1_3, b1_3, w2_3, b2_3))
    ref3 = channel_gate_ref(x3, w1_3, b1_3, w2_3, b2_3)
    assert jnp.allclose(out3, ref3, atol=1e-5, rtol=1e-5)

    print("KERNEL_OK")
</pallas_src>

<mosaic_0001>
module attributes {stable_mosaic.version = 11 : i64} {
  func.func @_channel_gate_kernel(%arg0: i32, %arg1: i32, %arg2: memref<2x32x256xf32, #tpu.memory_space<vmem>>, %arg3: memref<2x32xf32, #tpu.memory_space<vmem>>, %arg4: memref<2x1xf32, #tpu.memory_space<vmem>>, %arg5: memref<32x2xf32, #tpu.memory_space<vmem>>, %arg6: memref<32x1xf32, #tpu.memory_space<vmem>>, %arg7: memref<2x32x1xf32, #tpu.memory_space<vmem>>) attributes {dimension_semantics = [#tpu.dimension_semantics<parallel>, #tpu.dimension_semantics<arbitrary>], iteration_bounds = array<i64: 1, 1>, scalar_prefetch = 0 : i64, scratch_operands = 0 : i64, tpu.core_type = #tpu.core_type<tc>, window_params = [{transform_indices = @transform_0, window_bounds = array<i64: 2, 32, 256>}, {pipeline_mode = #tpu.pipeline_mode<synchronous>, transform_indices = @transform_1, window_bounds = array<i64: 2, 32>}, {pipeline_mode = #tpu.pipeline_mode<synchronous>, transform_indices = @transform_2, window_bounds = array<i64: 2, 1>}, {pipeline_mode = #tpu.pipeline_mode<synchronous>, transform_indices = @transform_3, window_bounds = array<i64: 32, 2>}, {pipeline_mode = #tpu.pipeline_mode<synchronous>, transform_indices = @transform_4, window_bounds = array<i64: 32, 1>}, {transform_indices = @transform_5, window_bounds = array<i64: 2, 32, 1>}]} {
    %cst = arith.constant 0.000000e+00 : f32
    %0 = vector.broadcast %cst : f32 to vector<32x256xf32>
    %cst_0 = arith.constant 0xFF800000 : f32
    %1 = vector.broadcast %cst_0 : f32 to vector<32x256xf32>
    %c0 = arith.constant 0 : index
    %c0_1 = arith.constant 0 : index
    %c0_2 = arith.constant 0 : index
    %2 = vector.load %arg2[%c0, %c0_1, %c0_2] : memref<2x32x256xf32, #tpu.memory_space<vmem>>, vector<1x32x256xf32>
    %3 = vector.shape_cast %2 : vector<1x32x256xf32> to vector<32x256xf32>
    %4 = arith.addf %0, %3 : vector<32x256xf32>
    %5 = arith.maximumf %1, %3 : vector<32x256xf32>
    %cst_3 = arith.constant dense<0.000000e+00> : vector<32xf32>
    %6 = vector.multi_reduction <add>, %4, %cst_3 [1] : vector<32x256xf32> to vector<32xf32>
    %7 = vector.shape_cast %6 : vector<32xf32> to vector<32x1xf32>
    %cst_4 = arith.constant dense<0xFF800000> : vector<32xf32>
    %8 = vector.multi_reduction <maximumf>, %5, %cst_4 [1] : vector<32x256xf32> to vector<32xf32>
    %9 = vector.shape_cast %8 : vector<32xf32> to vector<32x1xf32>
    %cst_5 = arith.constant 3.906250e-03 : f32
    %10 = vector.broadcast %cst_5 : f32 to vector<32x1xf32>
    %11 = arith.mulf %7, %10 : vector<32x1xf32>
    %12 = tpu.concatenate %11, %9 in 1 : vector<32x1xf32>, vector<32x1xf32> -> vector<32x2xf32>
    %c0_6 = arith.constant 0 : index
    %c0_7 = arith.constant 0 : index
    %13 = vector.load %arg3[%c0_6, %c0_7] : memref<2x32xf32, #tpu.memory_space<vmem>>, vector<2x32xf32>
    %cst_8 = arith.constant dense<0.000000e+00> : vector<2x2xf32>
    %14 = tpu.matmul %13, %12, %cst_8 {dimension_numbers = #tpu.dot_dimension_numbers<[1], [0], [0], [1], [0, 0, 1, 1], [], []>} : vector<2x32xf32>, vector<32x2xf32>, vector<2x2xf32> -> vector<2x2xf32>
    %c0_9 = arith.constant 0 : index
    %c0_10 = arith.constant 0 : index
    %15 = vector.load %arg4[%c0_9, %c0_10] : memref<2x1xf32, #tpu.memory_space<vmem>>, vector<2x1xf32>
    %16 = vector.broadcast %15 : vector<2x1xf32> to vector<2x2xf32>
    %17 = arith.addf %14, %16 : vector<2x2xf32>
    %cst_11 = arith.constant 0.000000e+00 : f32
    %18 = vector.broadcast %cst_11 : f32 to vector<2x2xf32>
    %19 = arith.maximumf %17, %18 : vector<2x2xf32>
    %c0_12 = arith.constant 0 : index
    %c0_13 = arith.constant 0 : index
    %20 = vector.load %arg5[%c0_12, %c0_13] : memref<32x2xf32, #tpu.memory_space<vmem>>, vector<32x2xf32>
    %cst_14 = arith.constant dense<0.000000e+00> : vector<32x2xf32>
    %21 = tpu.matmul %20, %19, %cst_14 {dimension_numbers = #tpu.dot_dimension_numbers<[1], [0], [0], [1], [0, 0, 1, 1], [], []>} : vector<32x2xf32>, vector<2x2xf32>, vector<32x2xf32> -> vector<32x2xf32>
    %c0_15 = arith.constant 0 : index
    %c0_16 = arith.constant 0 : index
    %22 = vector.load %arg6[%c0_15, %c0_16] : memref<32x1xf32, #tpu.memory_space<vmem>>, vector<32x1xf32>
    %23 = vector.broadcast %22 : vector<32x1xf32> to vector<32x2xf32>
    %24 = arith.addf %21, %23 : vector<32x2xf32>
    %25 = vector.extract_strided_slice %24 {offsets = [0, 0], sizes = [32, 1], strides = [1, 1]} : vector<32x2xf32> to vector<32x1xf32>
    %26 = vector.extract_strided_slice %24 {offsets = [0, 1], sizes = [32, 1], strides = [1, 1]} : vector<32x2xf32> to vector<32x1xf32>
    %27 = arith.addf %25, %26 : vector<32x1xf32>
    %28 = arith.negf %27 : vector<32x1xf32>
    %29 = math.exp %28 : vector<32x1xf32>
    %cst_17 = arith.constant 1.000000e+00 : f32
    %30 = vector.broadcast %cst_17 : f32 to vector<32x1xf32>
    %31 = arith.addf %30, %29 : vector<32x1xf32>
    %32 = arith.divf %30, %31 : vector<32x1xf32>
    %c0_18 = arith.constant 0 : index
    %c0_19 = arith.constant 0 : index
    %c0_20 = arith.constant 0 : index
    %33 = vector.load %arg7[%c0_18, %c0_19, %c0_20] : memref<2x32x1xf32, #tpu.memory_space<vmem>>, vector<1x32x1xf32>
    %34 = vector.shape_cast %33 : vector<1x32x1xf32> to vector<32x1xf32>
    %35 = vector.shape_cast %32 : vector<32x1xf32> to vector<1x32x1xf32>
    tpu.vector_store %arg7[%c0_18, %c0_19, %c0_20], %35 {strides = array<i32>} : memref<2x32x1xf32, #tpu.memory_space<vmem>>, vector<1x32x1xf32>,
    %cst_21 = arith.constant 0.000000e+00 : f32
    %36 = vector.broadcast %cst_21 : f32 to vector<32x256xf32>
    %cst_22 = arith.constant 0xFF800000 : f32
    %37 = vector.broadcast %cst_22 : f32 to vector<32x256xf32>
    %c1 = arith.constant 1 : index
    %c0_23 = arith.constant 0 : index
    %c0_24 = arith.constant 0 : index
    %38 = vector.load %arg2[%c1, %c0_23, %c0_24] : memref<2x32x256xf32, #tpu.memory_space<vmem>>, vector<1x32x256xf32>
    %39 = vector.shape_cast %38 : vector<1x32x256xf32> to vector<32x256xf32>
    %40 = arith.addf %36, %39 : vector<32x256xf32>
    %41 = arith.maximumf %37, %39 : vector<32x256xf32>
    %cst_25 = arith.constant dense<0.000000e+00> : vector<32xf32>
    %42 = vector.multi_reduction <add>, %40, %cst_25 [1] : vector<32x256xf32> to vector<32xf32>
    %43 = vector.shape_cast %42 : vector<32xf32> to vector<32x1xf32>
    %cst_26 = arith.constant dense<0xFF800000> : vector<32xf32>
    %44 = vector.multi_reduction <maximumf>, %41, %cst_26 [1] : vector<32x256xf32> to vector<32xf32>
    %45 = vector.shape_cast %44 : vector<32xf32> to vector<32x1xf32>
    %cst_27 = arith.constant 3.906250e-03 : f32
    %46 = vector.broadcast %cst_27 : f32 to vector<32x1xf32>
    %47 = arith.mulf %43, %46 : vector<32x1xf32>
    %48 = tpu.concatenate %47, %45 in 1 : vector<32x1xf32>, vector<32x1xf32> -> vector<32x2xf32>
    %c0_28 = arith.constant 0 : index
    %c0_29 = arith.constant 0 : index
    %49 = vector.load %arg3[%c0_28, %c0_29] : memref<2x32xf32, #tpu.memory_space<vmem>>, vector<2x32xf32>
    %cst_30 = arith.constant dense<0.000000e+00> : vector<2x2xf32>
    %50 = tpu.matmul %49, %48, %cst_30 {dimension_numbers = #tpu.dot_dimension_numbers<[1], [0], [0], [1], [0, 0, 1, 1], [], []>} : vector<2x32xf32>, vector<32x2xf32>, vector<2x2xf32> -> vector<2x2xf32>
    %c0_31 = arith.constant 0 : index
    %c0_32 = arith.constant 0 : index
    %51 = vector.load %arg4[%c0_31, %c0_32] : memref<2x1xf32, #tpu.memory_space<vmem>>, vector<2x1xf32>
    %52 = vector.broadcast %51 : vector<2x1xf32> to vector<2x2xf32>
    %53 = arith.addf %50, %52 : vector<2x2xf32>
    %cst_33 = arith.constant 0.000000e+00 : f32
    %54 = vector.broadcast %cst_33 : f32 to vector<2x2xf32>
    %55 = arith.maximumf %53, %54 : vector<2x2xf32>
    %c0_34 = arith.constant 0 : index
    %c0_35 = arith.constant 0 : index
    %56 = vector.load %arg5[%c0_34, %c0_35] : memref<32x2xf32, #tpu.memory_space<vmem>>, vector<32x2xf32>
    %cst_36 = arith.constant dense<0.000000e+00> : vector<32x2xf32>
    %57 = tpu.matmul %56, %55, %cst_36 {dimension_numbers = #tpu.dot_dimension_numbers<[1], [0], [0], [1], [0, 0, 1, 1], [], []>} : vector<32x2xf32>, vector<2x2xf32>, vector<32x2xf32> -> vector<32x2xf32>
    %c0_37 = arith.constant 0 : index
    %c0_38 = arith.constant 0 : index
    %58 = vector.load %arg6[%c0_37, %c0_38] : memref<32x1xf32, #tpu.memory_space<vmem>>, vector<32x1xf32>
    %59 = vector.broadcast %58 : vector<32x1xf32> to vector<32x2xf32>
    %60 = arith.addf %57, %59 : vector<32x2xf32>
    %61 = vector.extract_strided_slice %60 {offsets = [0, 0], sizes = [32, 1], strides = [1, 1]} : vector<32x2xf32> to vector<32x1xf32>
    %62 = vector.extract_strided_slice %60 {offsets = [0, 1], sizes = [32, 1], strides = [1, 1]} : vector<32x2xf32> to vector<32x1xf32>
    %63 = arith.addf %61, %62 : vector<32x1xf32>
    %64 = arith.negf %63 : vector<32x1xf32>
    %65 = math.exp %64 : vector<32x1xf32>
    %cst_39 = arith.constant 1.000000e+00 : f32
    %66 = vector.broadcast %cst_39 : f32 to vector<32x1xf32>
    %67 = arith.addf %66, %65 : vector<32x1xf32>
    %68 = arith.divf %66, %67 : vector<32x1xf32>
    %c1_40 = arith.constant 1 : index
    %c0_41 = arith.constant 0 : index
    %c0_42 = arith.constant 0 : index
    %69 = vector.load %arg7[%c1_40, %c0_41, %c0_42] : memref<2x32x1xf32, #tpu.memory_space<vmem>>, vector<1x32x1xf32>
    %70 = vector.shape_cast %69 : vector<1x32x1xf32> to vector<32x1xf32>
    %71 = vector.shape_cast %68 : vector<32x1xf32> to vector<1x32x1xf32>
    tpu.vector_store %arg7[%c1_40, %c0_41, %c0_42], %71 {strides = array<i32>} : memref<2x32x1xf32, #tpu.memory_space<vmem>>, vector<1x32x1xf32>,
    return
  }
  func.func @transform_0(%arg0: i32, %arg1: i32) -> (i32, i32, i32) {
    %c0_i32 = arith.constant 0 : i32
    %c0_i32_0 = arith.constant 0 : i32
    return %arg0, %c0_i32, %arg1 : i32, i32, i32
  }
  func.func @transform_1(%arg0: i32, %arg1: i32) -> (i32, i32) {
    %c0_i32 = arith.constant 0 : i32
    %c0_i32_0 = arith.constant 0 : i32
    %c0_i32_1 = arith.constant 0 : i32
    return %c0_i32, %c0_i32_0 : i32, i32
  }
  func.func @transform_2(%arg0: i32, %arg1: i32) -> (i32, i32) {
    %c0_i32 = arith.constant 0 : i32
    %c0_i32_0 = arith.constant 0 : i32
    %c0_i32_1 = arith.constant 0 : i32
    return %c0_i32, %c0_i32_0 : i32, i32
  }
  func.func @transform_3(%arg0: i32, %arg1: i32) -> (i32, i32) {
    %c0_i32 = arith.constant 0 : i32
    %c0_i32_0 = arith.constant 0 : i32
    %c0_i32_1 = arith.constant 0 : i32
    return %c0_i32, %c0_i32_0 : i32, i32
  }
  func.func @transform_4(%arg0: i32, %arg1: i32) -> (i32, i32) {
    %c0_i32 = arith.constant 0 : i32
    %c0_i32_0 = arith.constant 0 : i32
    %c0_i32_1 = arith.constant 0 : i32
    return %c0_i32, %c0_i32_0 : i32, i32
  }
  func.func @transform_5(%arg0: i32, %arg1: i32) -> (i32, i32, i32) {
    %c0_i32 = arith.constant 0 : i32
    %c0_i32_0 = arith.constant 0 : i32
    %c0_i32_1 = arith.constant 0 : i32
    return %arg0, %c0_i32, %c0_i32_0 : i32, i32, i32
  }
}

module attributes {stable_mosaic.version = 11 : i64} {
  func.func @_channel_gate_kernel(%arg0: i32, %arg1: i32, %arg2: memref<2x32x256xf32, #tpu.memory_space<vmem>>, %arg3: memref<2x32xf32, #tpu.memory_space<vmem>>, %arg4: memref<2x1xf32, #tpu.memory_space<vmem>>, %arg5: memref<32x2xf32, #tpu.memory_space<vmem>>, %arg6: memref<32x1xf32, #tpu.memory_space<vmem>>, %arg7: memref<2x32x1xf32, #tpu.memory_space<vmem>>) attributes {dimension_semantics = [#tpu.dimension_semantics<parallel>, #tpu.dimension_semantics<arbitrary>], iteration_bounds = array<i64: 1, 1>, scalar_prefetch = 0 : i64, scratch_operands = 0 : i64, tpu.core_type = #tpu.core_type<tc>, window_params = [{transform_indices = @transform_0, window_bounds = array<i64: 2, 32, 256>}, {pipeline_mode = #tpu.pipeline_mode<synchronous>, transform_indices = @transform_1, window_bounds = array<i64: 2, 32>}, {pipeline_mode = #tpu.pipeline_mode<synchronous>, transform_indices = @transform_2, window_bounds = array<i64: 2, 1>}, {pipeline_mode = #tpu.pipeline_mode<synchronous>, transform_indices = @transform_3, window_bounds = array<i64: 32, 2>}, {pipeline_mode = #tpu.pipeline_mode<synchronous>, transform_indices = @transform_4, window_bounds = array<i64: 32, 1>}, {transform_indices = @transform_5, window_bounds = array<i64: 2, 32, 1>}]} {
    %cst = arith.constant 0.000000e+00 : f32
    %0 = vector.broadcast %cst : f32 to vector<32x256xf32>
    %cst_0 = arith.constant 0xFF800000 : f32
    %1 = vector.broadcast %cst_0 : f32 to vector<32x256xf32>
    %c0 = arith.constant 0 : index
    %c0_1 = arith.constant 0 : index
    %c0_2 = arith.constant 0 : index
    %2 = vector.load %arg2[%c0, %c0_1, %c0_2] : memref<2x32x256xf32, #tpu.memory_space<vmem>>, vector<1x32x256xf32>
    %3 = vector.shape_cast %2 : vector<1x32x256xf32> to vector<32x256xf32>
    %4 = arith.addf %0, %3 : vector<32x256xf32>
    %5 = arith.maximumf %1, %3 : vector<32x256xf32>
    %cst_3 = arith.constant dense<0.000000e+00> : vector<32xf32>
    %6 = vector.multi_reduction <add>, %4, %cst_3 [1] : vector<32x256xf32> to vector<32xf32>
    %7 = vector.shape_cast %6 : vector<32xf32> to vector<32x1xf32>
    %cst_4 = arith.constant dense<0xFF800000> : vector<32xf32>
    %8 = vector.multi_reduction <maximumf>, %5, %cst_4 [1] : vector<32x256xf32> to vector<32xf32>
    %9 = vector.shape_cast %8 : vector<32xf32> to vector<32x1xf32>
    %cst_5 = arith.constant 3.906250e-03 : f32
    %10 = vector.broadcast %cst_5 : f32 to vector<32x1xf32>
    %11 = arith.mulf %7, %10 : vector<32x1xf32>
    %12 = tpu.concatenate %11, %9 in 1 : vector<32x1xf32>, vector<32x1xf32> -> vector<32x2xf32>
    %c0_6 = arith.constant 0 : index
    %c0_7 = arith.constant 0 : index
    %13 = vector.load %arg3[%c0_6, %c0_7] : memref<2x32xf32, #tpu.memory_space<vmem>>, vector<2x32xf32>
    %cst_8 = arith.constant dense<0.000000e+00> : vector<2x2xf32>
    %14 = tpu.matmul %13, %12, %cst_8 {dimension_numbers = #tpu.dot_dimension_numbers<[1], [0], [0], [1], [0, 0, 1, 1], [], []>} : vector<2x32xf32>, vector<32x2xf32>, vector<2x2xf32> -> vector<2x2xf32>
    %c0_9 = arith.constant 0 : index
    %c0_10 = arith.constant 0 : index
    %15 = vector.load %arg4[%c0_9, %c0_10] : memref<2x1xf32, #tpu.memory_space<vmem>>, vector<2x1xf32>
    %16 = vector.broadcast %15 : vector<2x1xf32> to vector<2x2xf32>
    %17 = arith.addf %14, %16 : vector<2x2xf32>
    %cst_11 = arith.constant 0.000000e+00 : f32
    %18 = vector.broadcast %cst_11 : f32 to vector<2x2xf32>
    %19 = arith.maximumf %17, %18 : vector<2x2xf32>
    %c0_12 = arith.constant 0 : index
    %c0_13 = arith.constant 0 : index
    %20 = vector.load %arg5[%c0_12, %c0_13] : memref<32x2xf32, #tpu.memory_space<vmem>>, vector<32x2xf32>
    %cst_14 = arith.constant dense<0.000000e+00> : vector<32x2xf32>
    %21 = tpu.matmul %20, %19, %cst_14 {dimension_numbers = #tpu.dot_dimension_numbers<[1], [0], [0], [1], [0, 0, 1, 1], [], []>} : vector<32x2xf32>, vector<2x2xf32>, vector<32x2xf32> -> vector<32x2xf32>
    %c0_15 = arith.constant 0 : index
    %c0_16 = arith.constant 0 : index
    %22 = vector.load %arg6[%c0_15, %c0_16] : memref<32x1xf32, #tpu.memory_space<vmem>>, vector<32x1xf32>
    %23 = vector.broadcast %22 : vector<32x1xf32> to vector<32x2xf32>
    %24 = arith.addf %21, %23 : vector<32x2xf32>
    %25 = vector.extract_strided_slice %24 {offsets = [0, 0], sizes = [32, 1], strides = [1, 1]} : vector<32x2xf32> to vector<32x1xf32>
    %26 = vector.extract_strided_slice %24 {offsets = [0, 1], sizes = [32, 1], strides = [1, 1]} : vector<32x2xf32> to vector<32x1xf32>
    %27 = arith.addf %25, %26 : vector<32x1xf32>
    %28 = arith.negf %27 : vector<32x1xf32>
    %29 = math.exp %28 : vector<32x1xf32>
    %cst_17 = arith.constant 1.000000e+00 : f32
    %30 = vector.broadcast %cst_17 : f32 to vector<32x1xf32>
    %31 = arith.addf %30, %29 : vector<32x1xf32>
    %32 = arith.divf %30, %31 : vector<32x1xf32>
    %c0_18 = arith.constant 0 : index
    %c0_19 = arith.constant 0 : index
    %c0_20 = arith.constant 0 : index
    %33 = vector.load %arg7[%c0_18, %c0_19, %c0_20] : memref<2x32x1xf32, #tpu.memory_space<vmem>>, vector<1x32x1xf32>
    %34 = vector.shape_cast %33 : vector<1x32x1xf32> to vector<32x1xf32>
    %35 = vector.shape_cast %32 : vector<32x1xf32> to vector<1x32x1xf32>
    tpu.vector_store %arg7[%c0_18, %c0_19, %c0_20], %35 {strides = array<i32>} : memref<2x32x1xf32, #tpu.memory_space<vmem>>, vector<1x32x1xf32>,
    %cst_21 = arith.constant 0.000000e+00 : f32
    %36 = vector.broadcast %cst_21 : f32 to vector<32x256xf32>
    %cst_22 = arith.constant 0xFF800000 : f32
    %37 = vector.broadcast %cst_22 : f32 to vector<32x256xf32>
    %c1 = arith.constant 1 : index
    %c0_23 = arith.constant 0 : index
    %c0_24 = arith.constant 0 : index
    %38 = vector.load %arg2[%c1, %c0_23, %c0_24] : memref<2x32x256xf32, #tpu.memory_space<vmem>>, vector<1x32x256xf32>
    %39 = vector.shape_cast %38 : vector<1x32x256xf32> to vector<32x256xf32>
    %40 = arith.addf %36, %39 : vector<32x256xf32>
    %41 = arith.maximumf %37, %39 : vector<32x256xf32>
    %cst_25 = arith.constant dense<0.000000e+00> : vector<32xf32>
    %42 = vector.multi_reduction <add>, %40, %cst_25 [1] : vector<32x256xf32> to vector<32xf32>
    %43 = vector.shape_cast %42 : vector<32xf32> to vector<32x1xf32>
    %cst_26 = arith.constant dense<0xFF800000> : vector<32xf32>
    %44 = vector.multi_reduction <maximumf>, %41, %cst_26 [1] : vector<32x256xf32> to vector<32xf32>
    %45 = vector.shape_cast %44 : vector<32xf32> to vector<32x1xf32>
    %cst_27 = arith.constant 3.906250e-03 : f32
    %46 = vector.broadcast %cst_27 : f32 to vector<32x1xf32>
    %47 = arith.mulf %43, %46 : vector<32x1xf32>
    %48 = tpu.concatenate %47, %45 in 1 : vector<32x1xf32>, vector<32x1xf32> -> vector<32x2xf32>
    %c0_28 = arith.constant 0 : index
    %c0_29 = arith.constant 0 : index
    %49 = vector.load %arg3[%c0_28, %c0_29] : memref<2x32xf32, #tpu.memory_space<vmem>>, vector<2x32xf32>
    %cst_30 = arith.constant dense<0.000000e+00> : vector<2x2xf32>
    %50 = tpu.matmul %49, %48, %cst_30 {dimension_numbers = #tpu.dot_dimension_numbers<[1], [0], [0], [1], [0, 0, 1, 1], [], []>} : vector<2x32xf32>, vector<32x2xf32>, vector<2x2xf32> -> vector<2x2xf32>
    %c0_31 = arith.constant 0 : index
    %c0_32 = arith.constant 0 : index
    %51 = vector.load %arg4[%c0_31, %c0_32] : memref<2x1xf32, #tpu.memory_space<vmem>>, vector<2x1xf32>
    %52 = vector.broadcast %51 : vector<2x1xf32> to vector<2x2xf32>
    %53 = arith.addf %50, %52 : vector<2x2xf32>
    %cst_33 = arith.constant 0.000000e+00 : f32
    %54 = vector.broadcast %cst_33 : f32 to vector<2x2xf32>
    %55 = arith.maximumf %53, %54 : vector<2x2xf32>
    %c0_34 = arith.constant 0 : index
    %c0_35 = arith.constant 0 : index
    %56 = vector.load %arg5[%c0_34, %c0_35] : memref<32x2xf32, #tpu.memory_space<vmem>>, vector<32x2xf32>
    %cst_36 = arith.constant dense<0.000000e+00> : vector<32x2xf32>
    %57 = tpu.matmul %56, %55, %cst_36 {dimension_numbers = #tpu.dot_dimension_numbers<[1], [0], [0], [1], [0, 0, 1, 1], [], []>} : vector<32x2xf32>, vector<2x2xf32>, vector<32x2xf32> -> vector<32x2xf32>
    %c0_37 = arith.constant 0 : index
    %c0_38 = arith.constant 0 : index
    %58 = vector.load %arg6[%c0_37, %c0_38] : memref<32x1xf32, #tpu.memory_space<vmem>>, vector<32x1xf32>
    %59 = vector.broadcast %58 : vector<32x1xf32> to vector<32x2xf32>
    %60 = arith.addf %57, %59 : vector<32x2xf32>
    %61 = vector.extract_strided_slice %60 {offsets = [0, 0], sizes = [32, 1], strides = [1, 1]} : vector<32x2xf32> to vector<32x1xf32>
    %62 = vector.extract_strided_slice %60 {offsets = [0, 1], sizes = [32, 1], strides = [1, 1]} : vector<32x2xf32> to vector<32x1xf32>
    %63 = arith.addf %61, %62 : vector<32x1xf32>
    %64 = arith.negf %63 : vector<32x1xf32>
    %65 = math.exp %64 : vector<32x1xf32>
    %cst_39 = arith.constant 1.000000e+00 : f32
    %66 = vector.broadcast %cst_39 : f32 to vector<32x1xf32>
    %67 = arith.addf %66, %65 : vector<32x1xf32>
    %68 = arith.divf %66, %67 : vector<32x1xf32>
    %c1_40 = arith.constant 1 : index
    %c0_41 = arith.constant 0 : index
    %c0_42 = arith.constant 0 : index
    %69 = vector.load %arg7[%c1_40, %c0_41, %c0_42] : memref<2x32x1xf32, #tpu.memory_space<vmem>>, vector<1x32x1xf32>
    %70 = vector.shape_cast %69 : vector<1x32x1xf32> to vector<32x1xf32>
    %71 = vector.shape_cast %68 : vector<32x1xf32> to vector<1x32x1xf32>
    tpu.vector_store %arg7[%c1_40, %c0_41, %c0_42], %71 {strides = array<i32>} : memref<2x32x1xf32, #tpu.memory_space<vmem>>, vector<1x32x1xf32>,
    return
  }
  func.func @transform_0(%arg0: i32, %arg1: i32) -> (i32, i32, i32) {
    %c0_i32 = arith.constant 0 : i32
    %c0_i32_0 = arith.constant 0 : i32
    return %arg0, %c0_i32, %arg1 : i32, i32, i32
  }
  func.func @transform_1(%arg0: i32, %arg1: i32) -> (i32, i32) {
    %c0_i32 = arith.constant 0 : i32
    %c0_i32_0 = arith.constant 0 : i32
    %c0_i32_1 = arith.constant 0 : i32
    return %c0_i32, %c0_i32_0 : i32, i32
  }
  func.func @transform_2(%arg0: i32, %arg1: i32) -> (i32, i32) {
    %c0_i32 = arith.constant 0 : i32
    %c0_i32_0 = arith.constant 0 : i32
    %c0_i32_1 = arith.constant 0 : i32
    return %c0_i32, %c0_i32_0 : i32, i32
  }
  func.func @transform_3(%arg0: i32, %arg1: i32) -> (i32, i32) {
    %c0_i32 = arith.constant 0 : i32
    %c0_i32_0 = arith.constant 0 : i32
    %c0_i32_1 = arith.constant 0 : i32
    return %c0_i32, %c0_i32_0 : i32, i32
  }
  func.func @transform_4(%arg0: i32, %arg1: i32) -> (i32, i32) {
    %c0_i32 = arith.constant 0 : i32
    %c0_i32_0 = arith.constant 0 : i32
    %c0_i32_1 = arith.constant 0 : i32
    return %c0_i32, %c0_i32_0 : i32, i32
  }
  func.func @transform_5(%arg0: i32, %arg1: i32) -> (i32, i32, i32) {
    %c0_i32 = arith.constant 0 : i32
    %c0_i32_0 = arith.constant 0 : i32
    %c0_i32_1 = arith.constant 0 : i32
    return %arg0, %c0_i32, %c0_i32_0 : i32, i32, i32
  }
}

</mosaic_0001>

<llo_original>
// kernel: tpu_custom_call.1
$region0: #{tpu_custom_call.1}
  #allocation0 [shape = 'u32[]', space=smem, size = 0x4, offset = 0x4, fixed_abs, tag = 'smem constant byte address 0x4 - core index']
  #allocation1 [shape = 'u32[144,128]{1,0:T(1,128)}', space=vmem, size = 0x12000, scoped, tag = 'internal scratch']
  %s0 = inlined_call_operand.hbm [shape: f32[2,32,256], index: 0, kind: input, shape index: {}]
  %s1 = inlined_call_operand.vmem [shape: f32[2,32], index: 1, kind: input, shape index: {}]
  %s2 = inlined_call_operand.vmem [shape: f32[2,1], index: 2, kind: input, shape index: {}]
  %s3 = inlined_call_operand.vmem [shape: f32[32,2], index: 3, kind: input, shape index: {}]
  %s4 = inlined_call_operand.vmem [shape: f32[32,1], index: 4, kind: input, shape index: {}]
  %s5 = inlined_call_operand.vmem [shape: f32[2,32,1], index: 5, kind: output, shape index: {}]
  %s6 = sld [smem:[#allocation0]]
  $region34: #{tpu_custom_call.1} parent=0
    _
  %s8 = ssub.s32 1, %s6
  %s9 = scalar_select 0, %s8, %s6
  $region1: #{tpu_custom_call.1} parent=0
    #allocation2 [shape = 'u8[65536]{0}', space=vmem, size = 0x10000, scoped, tag = 'input window, operand 0, single buffered']
    #allocation3 [shape = 's32[1]{0}', space=sflag, size = 0x4, scoped, tag = 'scoped memory for tpu_custom_call.1']
    %10 = vsyncpa [#allocation3], 0
    // Predicated region
    $region2: #{tpu_custom_call.1} parent=1 // pred_check
      _
    $region3: #{tpu_custom_call.1} parent=1 // pred_check_branch
      %12 = sbr.rel (0) target = $region5
    $region4: #{tpu_custom_call.1} parent=1 // pred_region
      %s14 = ssub.s32 2048, 2048
      %15 = vsyncadd [#allocation3], %s14
      %s16 = sshll.u32 [#allocation2], 4
      %s17 = int_to_ptr.vmem [resolvable:$true] %s16
      %22 = dma.hbm_to_vmem [thread:$0]  %s0, 2048, %s17, [#allocation3], 256, 256, 16
    $region5: #{tpu_custom_call.1} parent=1 // pred_fallthru
      _
    // Predicated region
    $region6: #{tpu_custom_call.1} parent=1 // pred_check
      _
    $region7: #{tpu_custom_call.1} parent=1 // pred_check_branch
      %24 = sbr.rel (0) target = $region9
    $region8: #{tpu_custom_call.1} parent=1 // pred_region
      _
    $region9: #{tpu_custom_call.1} parent=1 // pred_fallthru
      _
    // Predicated region
    $region10: #{tpu_custom_call.1} parent=1 // pred_check
      _
    $region11: #{tpu_custom_call.1} parent=1 // pred_check_branch
      %26 = sbr.rel (0) target = $region13
    $region12: #{tpu_custom_call.1} parent=1 // pred_region
      _
    $region13: #{tpu_custom_call.1} parent=1 // pred_fallthru
      _
    // Predicated region
    $region14: #{tpu_custom_call.1} parent=1 // pred_check
      _
    $region15: #{tpu_custom_call.1} parent=1 // pred_check_branch
      %28 = sbr.rel (0) target = $region17
    $region16: #{tpu_custom_call.1} parent=1 // pred_region
      _
    $region17: #{tpu_custom_call.1} parent=1 // pred_fallthru
      _
    // Predicated region
    $region18: #{tpu_custom_call.1} parent=1 // pred_check
      _
    $region19: #{tpu_custom_call.1} parent=1 // pred_check_branch
      %30 = sbr.rel (0) target = $region21
    $region20: #{tpu_custom_call.1} parent=1 // pred_region
      _
    $region21: #{tpu_custom_call.1} parent=1 // pred_fallthru
      _
    // Predicated region
    $region22: #{tpu_custom_call.1} parent=1 // pred_check
      _
    $region23: #{tpu_custom_call.1} parent=1 // pred_check_branch
      %32 = sbr.rel (0) target = $region25
    $region24: #{tpu_custom_call.1} parent=1 // pred_region
      %33 = dma.done [#allocation3], 2048
    $region25: #{tpu_custom_call.1} parent=1 // pred_fallthru
      _
    %v34 = vld [vmem:[#allocation2] sm:$0xff]
    %v35 = vld [vmem:[#allocation2 + $0x8] sm:$0xff]
    %v36 = vld [vmem:[#allocation2 + $0x10] sm:$0xff]
    %v37 = vld [vmem:[#allocation2 + $0x18] sm:$0xff]
    %v38 = vld [vmem:[#allocation2 + $0x20] sm:$0xff]
    %v39 = vld [vmem:[#allocation2 + $0x28] sm:$0xff]
    %v40 = vld [vmem:[#allocation2 + $0x30] sm:$0xff]
    %v41 = vld [vmem:[#allocation2 + $0x38] sm:$0xff]
    %v42 = vadd.f32 %v34, 0.0
    %v43 = vadd.f32 %v35, 0.0
    %v44 = vadd.f32 %v36, 0.0
    %v45 = vadd.f32 %v37, 0.0
    %v46 = vadd.f32 %v38, 0.0
    %v47 = vadd.f32 %v39, 0.0
    %v48 = vadd.f32 %v40, 0.0
    %v49 = vadd.f32 %v41, 0.0
    %v50 = vadd.f32 %v42, %v43
    %51 = vadd.xlane.f32.xlu0 %v50
    %v52 = vpop.xlane.xlu0 %51
    %v53 = vadd.f32 %v44, %v45
    %54 = vadd.xlane.f32.xlu0 %v53
    %v55 = vpop.xlane.xlu0 %54
    %v56 = vadd.f32 %v46, %v47
    %57 = vadd.xlane.f32.xlu0 %v56
    %v58 = vpop.xlane.xlu0 %57
    %v59 = vadd.f32 %v48, %v49
    %60 = vadd.xlane.f32.xlu0 %v59
    %v61 = vpop.xlane.xlu0 %60
    %v62 = vmax.f32 %v34, %v35
    %63 = vmax.xlane.f32.xlu0 %v62
    %v64 = vpop.xlane.xlu0 %63
    %v65 = vmax.f32 %v36, %v37
    %66 = vmax.xlane.f32.xlu0 %v65
    %v67 = vpop.xlane.xlu0 %66
    %v68 = vmax.f32 %v38, %v39
    %69 = vmax.xlane.f32.xlu0 %v68
    %v70 = vpop.xlane.xlu0 %69
    %v71 = vmax.f32 %v40, %v41
    %72 = vmax.xlane.f32.xlu0 %v71
    %v73 = vpop.xlane.xlu0 %72
    %v74 = vmul.f32 %v52, 0.00390625
    %v75 = vmul.f32 %v55, 0.00390625
    %v76 = vmul.f32 %v58, 0.00390625
    %v77 = vmul.f32 %v61, 0.00390625
    %vm78 = vcmask 7168
    %v79 = vsel %vm78, %v74, %v64
    %v80 = vsel %vm78, %v75, %v67
    %v81 = vsel %vm78, %v76, %v70
    %v82 = vsel %vm78, %v77, %v73
    %v83 = vld [vmem:[%s1] sm:$0x3]
    %v84 = vld [vmem:[%s2] sm:$0x3]
    %86 = vset.pattern.permute.xlu0 0
    %87 = vperm.xlu0 %86, %v84
    %v88 = vpop.permute.xlu0 %87
    %vm90 = vcmask 261120
    %v92 = vsel %vm90, %v83, 0
    %94 = vmatprep.subr.mxu0 0.0
    %95 = vmatpush1.msra.mxu0 0.0
    %96 = vmatprep.subr.mxu0 0.0
    %97 = vmatpush1.msra.mxu0 0.0
    %98 = vmatprep.subr.mxu0 0.0
    %99 = vmatpush1.msra.mxu0 0.0
    %100 = vmatprep.subr.mxu0 0.0
    %101 = vmatpush1.msra.mxu0 0.0
    %102 = vmatprep.subr.mxu0 0.0
    %103 = vmatpush1.msra.mxu0 0.0
    %104 = vmatprep.subr.mxu0 0.0
    %105 = vmatpush1.msra.mxu0 0.0
    %106 = vmatprep.subr.mxu0 0.0
    %107 = vmatpush1.msra.mxu0 0.0
    %108 = vmatprep.subr.mxu0 0.0
    %109 = vmatpush1.msra.mxu0 0.0
    %110 = vmatprep.subr.mxu0 0.0
    %111 = vmatpush1.msra.mxu0 0.0
    %112 = vmatprep.subr.mxu0 0.0
    %113 = vmatpush1.msra.mxu0 0.0
    %114 = vmatprep.subr.mxu0 0.0
    %115 = vmatpush1.msra.mxu0 0.0
    %116 = vmatprep.subr.mxu0 0.0
    %117 = vmatpush1.msra.mxu0 0.0
    %118 = vmatprep.subr.mxu0 0.0
    %119 = vmatpush1.msra.mxu0 %v82
    %120 = vmatprep.subr.mxu0 0.0
    %121 = vmatpush1.msra.mxu0 %v81
    %122 = vmatprep.subr.mxu0 0.0
    %123 = vmatpush1.msra.mxu0 %v80
    %124 = vmatprep.subr.mxu0 0.0
    %125 = vmatpush1.msra.mxu0 %v79
    %126 = vmatprep.subr.mxu0 0.0
    %127 = vmatpush2.msra.mxu0 0.0
    %128 = vmatprep.subr.mxu0 0.0
    %129 = vmatpush2.msra.mxu0 0.0
    %130 = vmatprep.subr.mxu0 0.0
    %131 = vmatpush2.msra.mxu0 0.0
    %132 = vmatprep.subr.mxu0 0.0
    %133 = vmatpush2.msra.mxu0 0.0
    %134 = vmatprep.subr.mxu0 0.0
    %135 = vmatpush2.msra.mxu0 0.0
    %136 = vmatprep.subr.mxu0 0.0
    %137 = vmatpush2.msra.mxu0 0.0
    %138 = vmatprep.subr.mxu0 0.0
    %139 = vmatpush2.msra.mxu0 0.0
    %140 = vmatprep.subr.mxu0 0.0
    %141 = vmatpush2.msra.mxu0 0.0
    %142 = vmatprep.subr.mxu0 0.0
    %143 = vmatpush2.msra.mxu0 0.0
    %144 = vmatprep.subr.mxu0 0.0
    %145 = vmatpush2.msra.mxu0 0.0
    %146 = vmatprep.subr.mxu0 0.0
    %147 = vmatpush2.msra.mxu0 0.0
    %148 = vmatprep.subr.mxu0 0.0
    %149 = vmatpush2.msra.mxu0 0.0
    %150 = vmatprep.subr.mxu0 0.0
    %151 = vmatpush2.msra.mxu0 0.0
    %152 = vmatprep.subr.mxu0 0.0
    %153 = vmatpush2.msra.mxu0 0.0
    %154 = vmatprep.subr.mxu0 0.0
    %155 = vmatpush2.msra.mxu0 0.0
    %156 = vmatprep.subr.mxu0 0.0
    %157 = vmatpush2.msra.mxu0 0.0
    %158 = vmatprep.mubr.f32.mxu0 0.0
    %159 = vmatmul.mubr.f32.gmra.mxu0 %v92
    %v160 = vpop.f32.mrf.mxu0
    %v161 = vadd.f32 %v88, %v160
    %v162 = vpop.f32.mrf.mxu0
    %163 = vdwg.mxu0
    %v164 = vmax.f32 %v161, 0.0
    %v165 = vld [vmem:[%s3] sm:$0xff]
    %v166 = vld [vmem:[%s3 + $0x8] sm:$0xff]
    %v167 = vld [vmem:[%s3 + $0x10] sm:$0xff]
    %v168 = vld [vmem:[%s3 + $0x18] sm:$0xff]
    %v169 = vld [vmem:[%s4] sm:$0xff]
    %v170 = vld [vmem:[%s4 + $0x8] sm:$0xff]
    %v171 = vld [vmem:[%s4 + $0x10] sm:$0xff]
    %v172 = vld [vmem:[%s4 + $0x18] sm:$0xff]
    %174 = vset.pattern.permute.xlu0 0
    %175 = vperm.xlu0 %174, %v169
    %v176 = vpop.permute.xlu0 %175
    %179 = vset.pattern.permute.xlu0 0
    %180 = vperm.xlu0 %179, %v170
    %v181 = vpop.permute.xlu0 %180
    %184 = vset.pattern.permute.xlu0 0
    %185 = vperm.xlu0 %184, %v171
    %v186 = vpop.permute.xlu0 %185
    %189 = vset.pattern.permute.xlu0 0
    %190 = vperm.xlu0 %189, %v172
    %v191 = vpop.permute.xlu0 %190
    %vm193 = vcmask 15360
    %v195 = vsel %vm193, %v165, 0
    %v198 = vsel %vm193, %v166, 0
    %v201 = vsel %vm193, %v167, 0
    %v204 = vsel %vm193, %v168, 0
    %vm206 = vcmask 1041408
    %v208 = vsel %vm206, %v164, 0
    %210 = vmatprep.subr.mxu0 0.0
    %211 = vmatpush1.msra.mxu0 0.0
    %212 = vmatprep.subr.mxu0 0.0
    %213 = vmatpush1.msra.mxu0 0.0
    %214 = vmatprep.subr.mxu0 0.0
    %215 = vmatpush1.msra.mxu0 0.0
    %216 = vmatprep.subr.mxu0 0.0
    %217 = vmatpush1.msra.mxu0 0.0
    %218 = vmatprep.subr.mxu0 0.0
    %219 = vmatpush1.msra.mxu0 0.0
    %220 = vmatprep.subr.mxu0 0.0
    %221 = vmatpush1.msra.mxu0 0.0
    %222 = vmatprep.subr.mxu0 0.0
    %223 = vmatpush1.msra.mxu0 0.0
    %224 = vmatprep.subr.mxu0 0.0
    %225 = vmatpush1.msra.mxu0 0.0
    %226 = vmatprep.subr.mxu0 0.0
    %227 = vmatpush1.msra.mxu0 0.0
    %228 = vmatprep.subr.mxu0 0.0
    %229 = vmatpush1.msra.mxu0 0.0
    %230 = vmatprep.subr.mxu0 0.0
    %231 = vmatpush1.msra.mxu0 0.0
    %232 = vmatprep.subr.mxu0 0.0
    %233 = vmatpush1.msra.mxu0 0.0
    %234 = vmatprep.subr.mxu0 0.0
    %235 = vmatpush1.msra.mxu0 0.0
    %236 = vmatprep.subr.mxu0 0.0
    %237 = vmatpush1.msra.mxu0 0.0
    %238 = vmatprep.subr.mxu0 0.0
    %239 = vmatpush1.msra.mxu0 0.0
    %240 = vmatprep.subr.mxu0 0.0
    %241 = vmatpush1.msra.mxu0 %v208
    %242 = vmatprep.subr.mxu0 0.0
    %243 = vmatpush2.msra.mxu0 0.0
    %244 = vmatprep.subr.mxu0 0.0
    %245 = vmatpush2.msra.mxu0 0.0
    %246 = vmatprep.subr.mxu0 0.0
    %247 = vmatpush2.msra.mxu0 0.0
    %248 = vmatprep.subr.mxu0 0.0
    %249 = vmatpush2.msra.mxu0 0.0
    %250 = vmatprep.subr.mxu0 0.0
    %251 = vmatpush2.msra.mxu0 0.0
    %252 = vmatprep.subr.mxu0 0.0
    %253 = vmatpush2.msra.mxu0 0.0
    %254 = vmatprep.subr.mxu0 0.0
    %255 = vmatpush2.msra.mxu0 0.0
    %256 = vmatprep.subr.mxu0 0.0
    %257 = vmatpush2.msra.mxu0 0.0
    %258 = vmatprep.subr.mxu0 0.0
    %259 = vmatpush2.msra.mxu0 0.0
    %260 = vmatprep.subr.mxu0 0.0
    %261 = vmatpush2.msra.mxu0 0.0
    %262 = vmatprep.subr.mxu0 0.0
    %263 = vmatpush2.msra.mxu0 0.0
    %264 = vmatprep.subr.mxu0 0.0
    %265 = vmatpush2.msra.mxu0 0.0
    %266 = vmatprep.subr.mxu0 0.0
    %267 = vmatpush2.msra.mxu0 0.0
    %268 = vmatprep.subr.mxu0 0.0
    %269 = vmatpush2.msra.mxu0 0.0
    %270 = vmatprep.subr.mxu0 0.0
    %271 = vmatpush2.msra.mxu0 0.0
    %272 = vmatprep.subr.mxu0 0.0
    %273 = vmatpush2.msra.mxu0 0.0
    %274 = vmatprep.mubr.f32.mxu0 0.0
    %275 = vmatmul.mubr.f32.gmra.mxu0 %v195
    %v276 = vpop.f32.mrf.mxu0
    %v277 = vadd.f32 %v176, %v276
    %v278 = vpop.f32.mrf.mxu0
    %279 = vmatprep.mubr.f32.mxu0 0.0
    %280 = vmatmul.mubr.f32.gmra.mxu0 %v198
    %v281 = vpop.f32.mrf.mxu0
    %v282 = vadd.f32 %v181, %v281
    %v283 = vpop.f32.mrf.mxu0
    %284 = vmatprep.mubr.f32.mxu0 0.0
    %285 = vmatmul.mubr.f32.gmra.mxu0 %v201
    %v286 = vpop.f32.mrf.mxu0
    %v287 = vadd.f32 %v186, %v286
    %v288 = vpop.f32.mrf.mxu0
    %289 = vmatprep.mubr.f32.mxu0 0.0
    %290 = vmatmul.mubr.f32.gmra.mxu0 %v204
    %v291 = vpop.f32.mrf.mxu0
    %v292 = vadd.f32 %v191, %v291
    %v293 = vpop.f32.mrf.mxu0
    %294 = vdwg.mxu0
    %299 = vrot.lane.b32.xlu0 %v277, 127
    %v300 = vpop.permute.xlu0 %299
    %301 = vrot.lane.b32.xlu0 %v282, 127
    %v302 = vpop.permute.xlu0 %301
    %303 = vrot.lane.b32.xlu0 %v287, 127
    %v304 = vpop.permute.xlu0 %303
    %305 = vrot.lane.b32.xlu0 %v292, 127
    %v306 = vpop.permute.xlu0 %305
    %v311 = vadd.f32 %v277, %v300
    %v312 = vadd.f32 %v282, %v302
    %v313 = vadd.f32 %v287, %v304
    %v314 = vadd.f32 %v292, %v306
    %v315 = vxor.u32 %v311, 2147483648
    %v316 = vxor.u32 %v312, 2147483648
    %v317 = vxor.u32 %v313, 2147483648
    %v318 = vxor.u32 %v314, 2147483648
    %v319 = vmul.f32 %v315, 1.442695
    %v320 = vpow.pop %v319
    %v321 = vmul.f32 %v316, 1.442695
    %v322 = vpow.pop %v321
    %v323 = vmul.f32 %v317, 1.442695
    %v324 = vpow.pop %v323
    %v325 = vmul.f32 %v318, 1.442695
    %v326 = vpow.pop %v325
    %v327 = vadd.f32 %v320, 1.0
    %v328 = vadd.f32 %v322, 1.0
    %v329 = vadd.f32 %v324, 1.0
    %v330 = vadd.f32 %v326, 1.0
    %v331 = vrcp.pop %v327
    %v332 = vmul.f32 1.0, %v331
    %v333 = vrcp.pop %v328
    %v334 = vmul.f32 1.0, %v333
    %v335 = vrcp.pop %v329
    %v336 = vmul.f32 1.0, %v335
    %v337 = vrcp.pop %v330
    %v338 = vmul.f32 1.0, %v337
    %339 = vst.msk [vmem:[%s5] sm:$0xff] %vm78, %v332
    %340 = vst.msk [vmem:[%s5 + $0x8] sm:$0xff] %vm78, %v334
    %341 = vst.msk [vmem:[%s5 + $0x10] sm:$0xff] %vm78, %v336
    %342 = vst.msk [vmem:[%s5 + $0x18] sm:$0xff] %vm78, %v338
    %s343 = scalar_lea.vmem [#allocation2], 64
    %v344 = vld [vmem:[%s343] sm:$0xff]
    %v345 = vld [vmem:[%s343 + $0x8] sm:$0xff]
    %v346 = vld [vmem:[%s343 + $0x10] sm:$0xff]
    %v347 = vld [vmem:[%s343 + $0x18] sm:$0xff]
    %v348 = vld [vmem:[%s343 + $0x20] sm:$0xff]
    %v349 = vld [vmem:[%s343 + $0x28] sm:$0xff]
    %v350 = vld [vmem:[%s343 + $0x30] sm:$0xff]
    %v351 = vld [vmem:[%s343 + $0x38] sm:$0xff]
    %v352 = vadd.f32 %v344, 0.0
    %v353 = vadd.f32 %v345, 0.0
    %v354 = vadd.f32 %v346, 0.0
    %v355 = vadd.f32 %v347, 0.0
    %v356 = vadd.f32 %v348, 0.0
    %v357 = vadd.f32 %v349, 0.0
    %v358 = vadd.f32 %v350, 0.0
    %v359 = vadd.f32 %v351, 0.0
    %v360 = vadd.f32 %v352, %v353
    %361 = vadd.xlane.f32.xlu0 %v360
    %v362 = vpop.xlane.xlu0 %361
    %v363 = vadd.f32 %v354, %v355
    %364 = vadd.xlane.f32.xlu0 %v363
    %v365 = vpop.xlane.xlu0 %364
    %v366 = vadd.f32 %v356, %v357
    %367 = vadd.xlane.f32.xlu0 %v366
    %v368 = vpop.xlane.xlu0 %367
    %v369 = vadd.f32 %v358, %v359
    %370 = vadd.xlane.f32.xlu0 %v369
    %v371 = vpop.xlane.xlu0 %370
    %v372 = vmax.f32 %v344, %v345
    %373 = vmax.xlane.f32.xlu0 %v372
    %v374 = vpop.xlane.xlu0 %373
    %v375 = vmax.f32 %v346, %v347
    %376 = vmax.xlane.f32.xlu0 %v375
    %v377 = vpop.xlane.xlu0 %376
    %v378 = vmax.f32 %v348, %v349
    %379 = vmax.xlane.f32.xlu0 %v378
    %v380 = vpop.xlane.xlu0 %379
    %v381 = vmax.f32 %v350, %v351
    %382 = vmax.xlane.f32.xlu0 %v381
    %v383 = vpop.xlane.xlu0 %382
    %v384 = vmul.f32 %v362, 0.00390625
    %v385 = vmul.f32 %v365, 0.00390625
    %v386 = vmul.f32 %v368, 0.00390625
    %v387 = vmul.f32 %v371, 0.00390625
    %v388 = vsel %vm78, %v384, %v374
    %v389 = vsel %vm78, %v385, %v377
    %v390 = vsel %vm78, %v386, %v380
    %v391 = vsel %vm78, %v387, %v383
    %v392 = vld [vmem:[%s1] sm:$0x3]
    %v393 = vld [vmem:[%s2] sm:$0x3]
    %395 = vset.pattern.permute.xlu0 0
    %396 = vperm.xlu0 %395, %v393
    %v397 = vpop.permute.xlu0 %396
    %v400 = vsel %vm90, %v392, 0
    %402 = vmatprep.subr.mxu0 0.0
    %403 = vmatpush1.msra.mxu0 0.0
    %404 = vmatprep.subr.mxu0 0.0
    %405 = vmatpush1.msra.mxu0 0.0
    %406 = vmatprep.subr.mxu0 0.0
    %407 = vmatpush1.msra.mxu0 0.0
    %408 = vmatprep.subr.mxu0 0.0
    %409 = vmatpush1.msra.mxu0 0.0
    %410 = vmatprep.subr.mxu0 0.0
    %411 = vmatpush1.msra.mxu0 0.0
    %412 = vmatprep.subr.mxu0 0.0
    %413 = vmatpush1.msra.mxu0 0.0
    %414 = vmatprep.subr.mxu0 0.0
    %415 = vmatpush1.msra.mxu0 0.0
    %416 = vmatprep.subr.mxu0 0.0
    %417 = vmatpush1.msra.mxu0 0.0
    %418 = vmatprep.subr.mxu0 0.0
    %419 = vmatpush1.msra.mxu0 0.0
    %420 = vmatprep.subr.mxu0 0.0
    %421 = vmatpush1.msra.mxu0 0.0
    %422 = vmatprep.subr.mxu0 0.0
    %423 = vmatpush1.msra.mxu0 0.0
    %424 = vmatprep.subr.mxu0 0.0
    %425 = vmatpush1.msra.mxu0 0.0
    %426 = vmatprep.subr.mxu0 0.0
    %427 = vmatpush1.msra.mxu0 %v391
    %428 = vmatprep.subr.mxu0 0.0
    %429 = vmatpush1.msra.mxu0 %v390
    %430 = vmatprep.subr.mxu0 0.0
    %431 = vmatpush1.msra.mxu0 %v389
    %432 = vmatprep.subr.mxu0 0.0
    %433 = vmatpush1.msra.mxu0 %v388
    %434 = vmatprep.subr.mxu0 0.0
    %435 = vmatpush2.msra.mxu0 0.0
    %436 = vmatprep.subr.mxu0 0.0
    %437 = vmatpush2.msra.mxu0 0.0
    %438 = vmatprep.subr.mxu0 0.0
    %439 = vmatpush2.msra.mxu0 0.0
    %440 = vmatprep.subr.mxu0 0.0
    %441 = vmatpush2.msra.mxu0 0.0
    %442 = vmatprep.subr.mxu0 0.0
    %443 = vmatpush2.msra.mxu0 0.0
    %444 = vmatprep.subr.mxu0 0.0
    %445 = vmatpush2.msra.mxu0 0.0
    %446 = vmatprep.subr.mxu0 0.0
    %447 = vmatpush2.msra.mxu0 0.0
    %448 = vmatprep.subr.mxu0 0.0
    %449 = vmatpush2.msra.mxu0 0.0
    %450 = vmatprep.subr.mxu0 0.0
    %451 = vmatpush2.msra.mxu0 0.0
    %452 = vmatprep.subr.mxu0 0.0
    %453 = vmatpush2.msra.mxu0 0.0
    %454 = vmatprep.subr.mxu0 0.0
    %455 = vmatpush2.msra.mxu0 0.0
    %456 = vmatprep.subr.mxu0 0.0
    %457 = vmatpush2.msra.mxu0 0.0
    %458 = vmatprep.subr.mxu0 0.0
    %459 = vmatpush2.msra.mxu0 0.0
    %460 = vmatprep.subr.mxu0 0.0
    %461 = vmatpush2.msra.mxu0 0.0
    %462 = vmatprep.subr.mxu0 0.0
    %463 = vmatpush2.msra.mxu0 0.0
    %464 = vmatprep.subr.mxu0 0.0
    %465 = vmatpush2.msra.mxu0 0.0
    %466 = vmatprep.mubr.f32.mxu0 0.0
    %467 = vmatmul.mubr.f32.gmra.mxu0 %v400
    %v468 = vpop.f32.mrf.mxu0
    %v469 = vadd.f32 %v397, %v468
    %v470 = vpop.f32.mrf.mxu0
    %471 = vdwg.mxu0
    %v472 = vmax.f32 %v469, 0.0
    %v473 = vld [vmem:[%s3] sm:$0xff]
    %v474 = vld [vmem:[%s3 + $0x8] sm:$0xff]
    %v475 = vld [vmem:[%s3 + $0x10] sm:$0xff]
    %v476 = vld [vmem:[%s3 + $0x18] sm:$0xff]
    %v477 = vld [vmem:[%s4] sm:$0xff]
    %v478 = vld [vmem:[%s4 + $0x8] sm:$0xff]
    %v479 = vld [vmem:[%s4 + $0x10] sm:$0xff]
    %v480 = vld [vmem:[%s4 + $0x18] sm:$0xff]
    %482 = vset.pattern.permute.xlu0 0
    %483 = vperm.xlu0 %482, %v477
    %v484 = vpop.permute.xlu0 %483
    %487 = vset.pattern.permute.xlu0 0
    %488 = vperm.xlu0 %487, %v478
    %v489 = vpop.permute.xlu0 %488
    %492 = vset.pattern.permute.xlu0 0
    %493 = vperm.xlu0 %492, %v479
    %v494 = vpop.permute.xlu0 %493
    %497 = vset.pattern.permute.xlu0 0
    %498 = vperm.xlu0 %497, %v480
    %v499 = vpop.permute.xlu0 %498
    %v502 = vsel %vm193, %v473, 0
    %v505 = vsel %vm193, %v474, 0
    %v508 = vsel %vm193, %v475, 0
    %v511 = vsel %vm193, %v476, 0
    %v514 = vsel %vm206, %v472, 0
    %516 = vmatprep.subr.mxu0 0.0
    %517 = vmatpush1.msra.mxu0 0.0
    %518 = vmatprep.subr.mxu0 0.0
    %519 = vmatpush1.msra.mxu0 0.0
    %520 = vmatprep.subr.mxu0 0.0
    %521 = vmatpush1.msra.mxu0 0.0
    %522 = vmatprep.subr.mxu0 0.0
    %523 = vmatpush1.msra.mxu0 0.0
    %524 = vmatprep.subr.mxu0 0.0
    %525 = vmatpush1.msra.mxu0 0.0
    %526 = vmatprep.subr.mxu0 0.0
    %527 = vmatpush1.msra.mxu0 0.0
    %528 = vmatprep.subr.mxu0 0.0
    %529 = vmatpush1.msra.mxu0 0.0
    %530 = vmatprep.subr.mxu0 0.0
    %531 = vmatpush1.msra.mxu0 0.0
    %532 = vmatprep.subr.mxu0 0.0
    %533 = vmatpush1.msra.mxu0 0.0
    %534 = vmatprep.subr.mxu0 0.0
    %535 = vmatpush1.msra.mxu0 0.0
    %536 = vmatprep.subr.mxu0 0.0
    %537 = vmatpush1.msra.mxu0 0.0
    %538 = vmatprep.subr.mxu0 0.0
    %539 = vmatpush1.msra.mxu0 0.0
    %540 = vmatprep.subr.mxu0 0.0
    %541 = vmatpush1.msra.mxu0 0.0
    %542 = vmatprep.subr.mxu0 0.0
    %543 = vmatpush1.msra.mxu0 0.0
    %544 = vmatprep.subr.mxu0 0.0
    %545 = vmatpush1.msra.mxu0 0.0
    %546 = vmatprep.subr.mxu0 0.0
    %547 = vmatpush1.msra.mxu0 %v514
    %548 = vmatprep.subr.mxu0 0.0
    %549 = vmatpush2.msra.mxu0 0.0
    %550 = vmatprep.subr.mxu0 0.0
    %551 = vmatpush2.msra.mxu0 0.0
    %552 = vmatprep.subr.mxu0 0.0
    %553 = vmatpush2.msra.mxu0 0.0
    %554 = vmatprep.subr.mxu0 0.0
    %555 = vmatpush2.msra.mxu0 0.0
    %556 = vmatprep.subr.mxu0 0.0
    %557 = vmatpush2.msra.mxu0 0.0
    %558 = vmatprep.subr.mxu0 0.0
    %559 = vmatpush2.msra.mxu0 0.0
    %560 = vmatprep.subr.mxu0 0.0
    %561 = vmatpush2.msra.mxu0 0.0
    %562 = vmatprep.subr.mxu0 0.0
    %563 = vmatpush2.msra.mxu0 0.0
    %564 = vmatprep.subr.mxu0 0.0
    %565 = vmatpush2.msra.mxu0 0.0
    %566 = vmatprep.subr.mxu0 0.0
    %567 = vmatpush2.msra.mxu0 0.0
    %568 = vmatprep.subr.mxu0 0.0
    %569 = vmatpush2.msra.mxu0 0.0
    %570 = vmatprep.subr.mxu0 0.0
    %571 = vmatpush2.msra.mxu0 0.0
    %572 = vmatprep.subr.mxu0 0.0
    %573 = vmatpush2.msra.mxu0 0.0
    %574 = vmatprep.subr.mxu0 0.0
    %575 = vmatpush2.msra.mxu0 0.0
    %576 = vmatprep.subr.mxu0 0.0
    %577 = vmatpush2.msra.mxu0 0.0
    %578 = vmatprep.subr.mxu0 0.0
    %579 = vmatpush2.msra.mxu0 0.0
    %580 = vmatprep.mubr.f32.mxu0 0.0
    %581 = vmatmul.mubr.f32.gmra.mxu0 %v502
    %v582 = vpop.f32.mrf.mxu0
    %v583 = vadd.f32 %v484, %v582
    %v584 = vpop.f32.mrf.mxu0
    %585 = vmatprep.mubr.f32.mxu0 0.0
    %586 = vmatmul.mubr.f32.gmra.mxu0 %v505
    %v587 = vpop.f32.mrf.mxu0
    %v588 = vadd.f32 %v489, %v587
    %v589 = vpop.f32.mrf.mxu0
    %590 = vmatprep.mubr.f32.mxu0 0.0
    %591 = vmatmul.mubr.f32.gmra.mxu0 %v508
    %v592 = vpop.f32.mrf.mxu0
    %v593 = vadd.f32 %v494, %v592
    %v594 = vpop.f32.mrf.mxu0
    %595 = vmatprep.mubr.f32.mxu0 0.0
    %596 = vmatmul.mubr.f32.gmra.mxu0 %v511
    %v597 = vpop.f32.mrf.mxu0
    %v598 = vadd.f32 %v499, %v597
    %v599 = vpop.f32.mrf.mxu0
    %600 = vdwg.mxu0
    %605 = vrot.lane.b32.xlu0 %v583, 127
    %v606 = vpop.permute.xlu0 %605
    %607 = vrot.lane.b32.xlu0 %v588, 127
    %v608 = vpop.permute.xlu0 %607
    %609 = vrot.lane.b32.xlu0 %v593, 127
    %v610 = vpop.permute.xlu0 %609
    %611 = vrot.lane.b32.xlu0 %v598, 127
    %v612 = vpop.permute.xlu0 %611
    %v617 = vadd.f32 %v583, %v606
    %v618 = vadd.f32 %v588, %v608
    %v619 = vadd.f32 %v593, %v610
    %v620 = vadd.f32 %v598, %v612
    %v621 = vxor.u32 %v617, 2147483648
    %v622 = vxor.u32 %v618, 2147483648
    %v623 = vxor.u32 %v619, 2147483648
    %v624 = vxor.u32 %v620, 2147483648
    %v625 = vmul.f32 %v621, 1.442695
    %v626 = vpow.pop %v625
    %v627 = vmul.f32 %v622, 1.442695
    %v628 = vpow.pop %v627
    %v629 = vmul.f32 %v623, 1.442695
    %v630 = vpow.pop %v629
    %v631 = vmul.f32 %v624, 1.442695
    %v632 = vpow.pop %v631
    %v633 = vadd.f32 %v626, 1.0
    %v634 = vadd.f32 %v628, 1.0
    %v635 = vadd.f32 %v630, 1.0
    %v636 = vadd.f32 %v632, 1.0
    %v637 = vrcp.pop %v633
    %v638 = vmul.f32 1.0, %v637
    %v639 = vrcp.pop %v634
    %v640 = vmul.f32 1.0, %v639
    %v641 = vrcp.pop %v635
    %v642 = vmul.f32 1.0, %v641
    %v643 = vrcp.pop %v636
    %v644 = vmul.f32 1.0, %v643
    %s645 = scalar_lea.vmem %s5, 32
    %646 = vst.msk [vmem:[%s645] sm:$0xff] %vm78, %v638
    %647 = vst.msk [vmem:[%s645 + $0x8] sm:$0xff] %vm78, %v640
    %648 = vst.msk [vmem:[%s645 + $0x10] sm:$0xff] %vm78, %v642
    %649 = vst.msk [vmem:[%s645 + $0x18] sm:$0xff] %vm78, %v644
    // Predicated region
    $region26: #{tpu_custom_call.1} parent=1 // pred_check
      _
    $region27: #{tpu_custom_call.1} parent=1 // pred_check_branch
      %651 = sbr.rel (0) target = $region29
    $region28: #{tpu_custom_call.1} parent=1 // pred_region
      _
    $region29: #{tpu_custom_call.1} parent=1 // pred_fallthru
      _
    // Predicated region
    $region30: #{tpu_custom_call.1} parent=1 // pred_check
      _
    $region31: #{tpu_custom_call.1} parent=1 // pred_check_branch
      %653 = sbr.rel (0) target = $region33
    $region32: #{tpu_custom_call.1} parent=1 // pred_region
      _
    $region33: #{tpu_custom_call.1} parent=1 // pred_fallthru
      _
    %654 = vsyncpa [#allocation3], 1

// kernel: tpu_custom_call.1
$region0: #{tpu_custom_call.1}
  #allocation0 [shape = 'u32[]', space=smem, size = 0x4, offset = 0x4, fixed_abs, tag = 'smem constant byte address 0x4 - core index']
  #allocation1 [shape = 'u32[144,128]{1,0:T(1,128)}', space=vmem, size = 0x12000, scoped, tag = 'internal scratch']
  %s0 = inlined_call_operand.hbm [shape: f32[2,32,256], index: 0, kind: input, shape index: {}]
  %s1 = inlined_call_operand.vmem [shape: f32[2,32], index: 1, kind: input, shape index: {}]
  %s2 = inlined_call_operand.vmem [shape: f32[2,1], index: 2, kind: input, shape index: {}]
  %s3 = inlined_call_operand.vmem [shape: f32[32,2], index: 3, kind: input, shape index: {}]
  %s4 = inlined_call_operand.vmem [shape: f32[32,1], index: 4, kind: input, shape index: {}]
  %s5 = inlined_call_operand.vmem [shape: f32[2,32,1], index: 5, kind: output, shape index: {}]
  %s6 = sld [smem:[#allocation0]]
  $region34: #{tpu_custom_call.1} parent=0
    _
  %s8 = ssub.s32 1, %s6
  %s9 = scalar_select 0, %s8, %s6
  $region1: #{tpu_custom_call.1} parent=0
    #allocation2 [shape = 'u8[65536]{0}', space=vmem, size = 0x10000, scoped, tag = 'input window, operand 0, single buffered']
    #allocation3 [shape = 's32[1]{0}', space=sflag, size = 0x4, scoped, tag = 'scoped memory for tpu_custom_call.1']
    %10 = vsyncpa [#allocation3], 0
    // Predicated region
    $region2: #{tpu_custom_call.1} parent=1 // pred_check
      _
    $region3: #{tpu_custom_call.1} parent=1 // pred_check_branch
      %12 = sbr.rel (0) target = $region5
    $region4: #{tpu_custom_call.1} parent=1 // pred_region
      %s14 = ssub.s32 2048, 2048
      %15 = vsyncadd [#allocation3], %s14
      %s16 = sshll.u32 [#allocation2], 4
      %s17 = int_to_ptr.vmem [resolvable:$true] %s16
      %22 = dma.hbm_to_vmem [thread:$0]  %s0, 2048, %s17, [#allocation3], 256, 256, 16
    $region5: #{tpu_custom_call.1} parent=1 // pred_fallthru
      _
    // Predicated region
    $region6: #{tpu_custom_call.1} parent=1 // pred_check
      _
    $region7: #{tpu_custom_call.1} parent=1 // pred_check_branch
      %24 = sbr.rel (0) target = $region9
    $region8: #{tpu_custom_call.1} parent=1 // pred_region
      _
    $region9: #{tpu_custom_call.1} parent=1 // pred_fallthru
      _
    // Predicated region
    $region10: #{tpu_custom_call.1} parent=1 // pred_check
      _
    $region11: #{tpu_custom_call.1} parent=1 // pred_check_branch
      %26 = sbr.rel (0) target = $region13
    $region12: #{tpu_custom_call.1} parent=1 // pred_region
      _
    $region13: #{tpu_custom_call.1} parent=1 // pred_fallthru
      _
    // Predicated region
    $region14: #{tpu_custom_call.1} parent=1 // pred_check
      _
    $region15: #{tpu_custom_call.1} parent=1 // pred_check_branch
      %28 = sbr.rel (0) target = $region17
    $region16: #{tpu_custom_call.1} parent=1 // pred_region
      _
    $region17: #{tpu_custom_call.1} parent=1 // pred_fallthru
      _
    // Predicated region
    $region18: #{tpu_custom_call.1} parent=1 // pred_check
      _
    $region19: #{tpu_custom_call.1} parent=1 // pred_check_branch
      %30 = sbr.rel (0) target = $region21
    $region20: #{tpu_custom_call.1} parent=1 // pred_region
      _
    $region21: #{tpu_custom_call.1} parent=1 // pred_fallthru
      _
    // Predicated region
    $region22: #{tpu_custom_call.1} parent=1 // pred_check
      _
    $region23: #{tpu_custom_call.1} parent=1 // pred_check_branch
      %32 = sbr.rel (0) target = $region25
    $region24: #{tpu_custom_call.1} parent=1 // pred_region
      %33 = dma.done [#allocation3], 2048
    $region25: #{tpu_custom_call.1} parent=1 // pred_fallthru
      _
    %v34 = vld [vmem:[#allocation2] sm:$0xff]
    %v35 = vld [vmem:[#allocation2 + $0x8] sm:$0xff]
    %v36 = vld [vmem:[#allocation2 + $0x10] sm:$0xff]
    %v37 = vld [vmem:[#allocation2 + $0x18] sm:$0xff]
    %v38 = vld [vmem:[#allocation2 + $0x20] sm:$0xff]
    %v39 = vld [vmem:[#allocation2 + $0x28] sm:$0xff]
    %v40 = vld [vmem:[#allocation2 + $0x30] sm:$0xff]
    %v41 = vld [vmem:[#allocation2 + $0x38] sm:$0xff]
    %v42 = vadd.f32 %v34, 0.0
    %v43 = vadd.f32 %v35, 0.0
    %v44 = vadd.f32 %v36, 0.0
    %v45 = vadd.f32 %v37, 0.0
    %v46 = vadd.f32 %v38, 0.0
    %v47 = vadd.f32 %v39, 0.0
    %v48 = vadd.f32 %v40, 0.0
    %v49 = vadd.f32 %v41, 0.0
    %v50 = vadd.f32 %v42, %v43
    %51 = vadd.xlane.f32.xlu0 %v50
    %v52 = vpop.xlane.xlu0 %51
    %v53 = vadd.f32 %v44, %v45
    %54 = vadd.xlane.f32.xlu0 %v53
    %v55 = vpop.xlane.xlu0 %54
    %v56 = vadd.f32 %v46, %v47
    %57 = vadd.xlane.f32.xlu0 %v56
    %v58 = vpop.xlane.xlu0 %57
    %v59 = vadd.f32 %v48, %v49
    %60 = vadd.xlane.f32.xlu0 %v59
    %v61 = vpop.xlane.xlu0 %60
    %v62 = vmax.f32 %v34, %v35
    %63 = vmax.xlane.f32.xlu0 %v62
    %v64 = vpop.xlane.xlu0 %63
    %v65 = vmax.f32 %v36, %v37
    %66 = vmax.xlane.f32.xlu0 %v65
    %v67 = vpop.xlane.xlu0 %66
    %v68 = vmax.f32 %v38, %v39
    %69 = vmax.xlane.f32.xlu0 %v68
    %v70 = vpop.xlane.xlu0 %69
    %v71 = vmax.f32 %v40, %v41
    %72 = vmax.xlane.f32.xlu0 %v71
    %v73 = vpop.xlane.xlu0 %72
    %v74 = vmul.f32 %v52, 0.00390625
    %v75 = vmul.f32 %v55, 0.00390625
    %v76 = vmul.f32 %v58, 0.00390625
    %v77 = vmul.f32 %v61, 0.00390625
    %vm78 = vcmask 7168
    %v79 = vsel %vm78, %v74, %v64
    %v80 = vsel %vm78, %v75, %v67
    %v81 = vsel %vm78, %v76, %v70
    %v82 = vsel %vm78, %v77, %v73
    %v83 = vld [vmem:[%s1] sm:$0x3]
    %v84 = vld [vmem:[%s2] sm:$0x3]
    %86 = vset.pattern.permute.xlu0 0
    %87 = vperm.xlu0 %86, %v84
    %v88 = vpop.permute.xlu0 %87
    %vm90 = vcmask 261120
    %v92 = vsel %vm90, %v83, 0
    %94 = vmatprep.subr.mxu0 0.0
    %95 = vmatpush1.msra.mxu0 0.0
    %96 = vmatprep.subr.mxu0 0.0
    %97 = vmatpush1.msra.mxu0 0.0
    %98 = vmatprep.subr.mxu0 0.0
    %99 = vmatpush1.msra.mxu0 0.0
    %100 = vmatprep.subr.mxu0 0.0
    %101 = vmatpush1.msra.mxu0 0.0
    %102 = vmatprep.subr.mxu0 0.0
    %103 = vmatpush1.msra.mxu0 0.0
    %104 = vmatprep.subr.mxu0 0.0
    %105 = vmatpush1.msra.mxu0 0.0
    %106 = vmatprep.subr.mxu0 0.0
    %107 = vmatpush1.msra.mxu0 0.0
    %108 = vmatprep.subr.mxu0 0.0
    %109 = vmatpush1.msra.mxu0 0.0
    %110 = vmatprep.subr.mxu0 0.0
    %111 = vmatpush1.msra.mxu0 0.0
    %112 = vmatprep.subr.mxu0 0.0
    %113 = vmatpush1.msra.mxu0 0.0
    %114 = vmatprep.subr.mxu0 0.0
    %115 = vmatpush1.msra.mxu0 0.0
    %116 = vmatprep.subr.mxu0 0.0
    %117 = vmatpush1.msra.mxu0 0.0
    %118 = vmatprep.subr.mxu0 0.0
    %119 = vmatpush1.msra.mxu0 %v82
    %120 = vmatprep.subr.mxu0 0.0
    %121 = vmatpush1.msra.mxu0 %v81
    %122 = vmatprep.subr.mxu0 0.0
    %123 = vmatpush1.msra.mxu0 %v80
    %124 = vmatprep.subr.mxu0 0.0
    %125 = vmatpush1.msra.mxu0 %v79
    %126 = vmatprep.subr.mxu0 0.0
    %127 = vmatpush2.msra.mxu0 0.0
    %128 = vmatprep.subr.mxu0 0.0
    %129 = vmatpush2.msra.mxu0 0.0
    %130 = vmatprep.subr.mxu0 0.0
    %131 = vmatpush2.msra.mxu0 0.0
    %132 = vmatprep.subr.mxu0 0.0
    %133 = vmatpush2.msra.mxu0 0.0
    %134 = vmatprep.subr.mxu0 0.0
    %135 = vmatpush2.msra.mxu0 0.0
    %136 = vmatprep.subr.mxu0 0.0
    %137 = vmatpush2.msra.mxu0 0.0
    %138 = vmatprep.subr.mxu0 0.0
    %139 = vmatpush2.msra.mxu0 0.0
    %140 = vmatprep.subr.mxu0 0.0
    %141 = vmatpush2.msra.mxu0 0.0
    %142 = vmatprep.subr.mxu0 0.0
    %143 = vmatpush2.msra.mxu0 0.0
    %144 = vmatprep.subr.mxu0 0.0
    %145 = vmatpush2.msra.mxu0 0.0
    %146 = vmatprep.subr.mxu0 0.0
    %147 = vmatpush2.msra.mxu0 0.0
    %148 = vmatprep.subr.mxu0 0.0
    %149 = vmatpush2.msra.mxu0 0.0
    %150 = vmatprep.subr.mxu0 0.0
    %151 = vmatpush2.msra.mxu0 0.0
    %152 = vmatprep.subr.mxu0 0.0
    %153 = vmatpush2.msra.mxu0 0.0
    %154 = vmatprep.subr.mxu0 0.0
    %155 = vmatpush2.msra.mxu0 0.0
    %156 = vmatprep.subr.mxu0 0.0
    %157 = vmatpush2.msra.mxu0 0.0
    %158 = vmatprep.mubr.f32.mxu0 0.0
    %159 = vmatmul.mubr.f32.gmra.mxu0 %v92
    %v160 = vpop.f32.mrf.mxu0
    %v161 = vadd.f32 %v88, %v160
    %v162 = vpop.f32.mrf.mxu0
    %163 = vdwg.mxu0
    %v164 = vmax.f32 %v161, 0.0
    %v165 = vld [vmem:[%s3] sm:$0xff]
    %v166 = vld [vmem:[%s3 + $0x8] sm:$0xff]
    %v167 = vld [vmem:[%s3 + $0x10] sm:$0xff]
    %v168 = vld [vmem:[%s3 + $0x18] sm:$0xff]
    %v169 = vld [vmem:[%s4] sm:$0xff]
    %v170 = vld [vmem:[%s4 + $0x8] sm:$0xff]
    %v171 = vld [vmem:[%s4 + $0x10] sm:$0xff]
    %v172 = vld [vmem:[%s4 + $0x18] sm:$0xff]
    %174 = vset.pattern.permute.xlu0 0
    %175 = vperm.xlu0 %174, %v169
    %v176 = vpop.permute.xlu0 %175
    %179 = vset.pattern.permute.xlu0 0
    %180 = vperm.xlu0 %179, %v170
    %v181 = vpop.permute.xlu0 %180
    %184 = vset.pattern.permute.xlu0 0
    %185 = vperm.xlu0 %184, %v171
    %v186 = vpop.permute.xlu0 %185
    %189 = vset.pattern.permute.xlu0 0
    %190 = vperm.xlu0 %189, %v172
    %v191 = vpop.permute.xlu0 %190
    %vm193 = vcmask 15360
    %v195 = vsel %vm193, %v165, 0
    %v198 = vsel %vm193, %v166, 0
    %v201 = vsel %vm193, %v167, 0
    %v204 = vsel %vm193, %v168, 0
    %vm206 = vcmask 1041408
    %v208 = vsel %vm206, %v164, 0
    %210 = vmatprep.subr.mxu0 0.0
    %211 = vmatpush1.msra.mxu0 0.0
    %212 = vmatprep.subr.mxu0 0.0
    %213 = vmatpush1.msra.mxu0 0.0
    %214 = vmatprep.subr.mxu0 0.0
    %215 = vmatpush1.msra.mxu0 0.0
    %216 = vmatprep.subr.mxu0 0.0
    %217 = vmatpush1.msra.mxu0 0.0
    %218 = vmatprep.subr.mxu0 0.0
    %219 = vmatpush1.msra.mxu0 0.0
    %220 = vmatprep.subr.mxu0 0.0
    %221 = vmatpush1.msra.mxu0 0.0
    %222 = vmatprep.subr.mxu0 0.0
    %223 = vmatpush1.msra.mxu0 0.0
    %224 = vmatprep.subr.mxu0 0.0
    %225 = vmatpush1.msra.mxu0 0.0
    %226 = vmatprep.subr.mxu0 0.0
    %227 = vmatpush1.msra.mxu0 0.0
    %228 = vmatprep.subr.mxu0 0.0
    %229 = vmatpush1.msra.mxu0 0.0
    %230 = vmatprep.subr.mxu0 0.0
    %231 = vmatpush1.msra.mxu0 0.0
    %232 = vmatprep.subr.mxu0 0.0
    %233 = vmatpush1.msra.mxu0 0.0
    %234 = vmatprep.subr.mxu0 0.0
    %235 = vmatpush1.msra.mxu0 0.0
    %236 = vmatprep.subr.mxu0 0.0
    %237 = vmatpush1.msra.mxu0 0.0
    %238 = vmatprep.subr.mxu0 0.0
    %239 = vmatpush1.msra.mxu0 0.0
    %240 = vmatprep.subr.mxu0 0.0
    %241 = vmatpush1.msra.mxu0 %v208
    %242 = vmatprep.subr.mxu0 0.0
    %243 = vmatpush2.msra.mxu0 0.0
    %244 = vmatprep.subr.mxu0 0.0
    %245 = vmatpush2.msra.mxu0 0.0
    %246 = vmatprep.subr.mxu0 0.0
    %247 = vmatpush2.msra.mxu0 0.0
    %248 = vmatprep.subr.mxu0 0.0
    %249 = vmatpush2.msra.mxu0 0.0
    %250 = vmatprep.subr.mxu0 0.0
    %251 = vmatpush2.msra.mxu0 0.0
    %252 = vmatprep.subr.mxu0 0.0
    %253 = vmatpush2.msra.mxu0 0.0
    %254 = vmatprep.subr.mxu0 0.0
    %255 = vmatpush2.msra.mxu0 0.0
    %256 = vmatprep.subr.mxu0 0.0
    %257 = vmatpush2.msra.mxu0 0.0
    %258 = vmatprep.subr.mxu0 0.0
    %259 = vmatpush2.msra.mxu0 0.0
    %260 = vmatprep.subr.mxu0 0.0
    %261 = vmatpush2.msra.mxu0 0.0
    %262 = vmatprep.subr.mxu0 0.0
    %263 = vmatpush2.msra.mxu0 0.0
    %264 = vmatprep.subr.mxu0 0.0
    %265 = vmatpush2.msra.mxu0 0.0
    %266 = vmatprep.subr.mxu0 0.0
    %267 = vmatpush2.msra.mxu0 0.0
    %268 = vmatprep.subr.mxu0 0.0
    %269 = vmatpush2.msra.mxu0 0.0
    %270 = vmatprep.subr.mxu0 0.0
    %271 = vmatpush2.msra.mxu0 0.0
    %272 = vmatprep.subr.mxu0 0.0
    %273 = vmatpush2.msra.mxu0 0.0
    %274 = vmatprep.mubr.f32.mxu0 0.0
    %275 = vmatmul.mubr.f32.gmra.mxu0 %v195
    %v276 = vpop.f32.mrf.mxu0
    %v277 = vadd.f32 %v176, %v276
    %v278 = vpop.f32.mrf.mxu0
    %279 = vmatprep.mubr.f32.mxu0 0.0
    %280 = vmatmul.mubr.f32.gmra.mxu0 %v198
    %v281 = vpop.f32.mrf.mxu0
    %v282 = vadd.f32 %v181, %v281
    %v283 = vpop.f32.mrf.mxu0
    %284 = vmatprep.mubr.f32.mxu0 0.0
    %285 = vmatmul.mubr.f32.gmra.mxu0 %v201
    %v286 = vpop.f32.mrf.mxu0
    %v287 = vadd.f32 %v186, %v286
    %v288 = vpop.f32.mrf.mxu0
    %289 = vmatprep.mubr.f32.mxu0 0.0
    %290 = vmatmul.mubr.f32.gmra.mxu0 %v204
    %v291 = vpop.f32.mrf.mxu0
    %v292 = vadd.f32 %v191, %v291
    %v293 = vpop.f32.mrf.mxu0
    %294 = vdwg.mxu0
    %299 = vrot.lane.b32.xlu0 %v277, 127
    %v300 = vpop.permute.xlu0 %299
    %301 = vrot.lane.b32.xlu0 %v282, 127
    %v302 = vpop.permute.xlu0 %301
    %303 = vrot.lane.b32.xlu0 %v287, 127
    %v304 = vpop.permute.xlu0 %303
    %305 = vrot.lane.b32.xlu0 %v292, 127
    %v306 = vpop.permute.xlu0 %305
    %v311 = vadd.f32 %v277, %v300
    %v312 = vadd.f32 %v282, %v302
    %v313 = vadd.f32 %v287, %v304
    %v314 = vadd.f32 %v292, %v306
    %v315 = vxor.u32 %v311, 2147483648
    %v316 = vxor.u32 %v312, 2147483648
    %v317 = vxor.u32 %v313, 2147483648
    %v318 = vxor.u32 %v314, 2147483648
    %v319 = vmul.f32 %v315, 1.442695
    %v320 = vpow.pop %v319
    %v321 = vmul.f32 %v316, 1.442695
    %v322 = vpow.pop %v321
    %v323 = vmul.f32 %v317, 1.442695
    %v324 = vpow.pop %v323
    %v325 = vmul.f32 %v318, 1.442695
    %v326 = vpow.pop %v325
    %v327 = vadd.f32 %v320, 1.0
    %v328 = vadd.f32 %v322, 1.0
    %v329 = vadd.f32 %v324, 1.0
    %v330 = vadd.f32 %v326, 1.0
    %v331 = vrcp.pop %v327
    %v332 = vmul.f32 1.0, %v331
    %v333 = vrcp.pop %v328
    %v334 = vmul.f32 1.0, %v333
    %v335 = vrcp.pop %v329
    %v336 = vmul.f32 1.0, %v335
    %v337 = vrcp.pop %v330
    %v338 = vmul.f32 1.0, %v337
    %339 = vst.msk [vmem:[%s5] sm:$0xff] %vm78, %v332
    %340 = vst.msk [vmem:[%s5 + $0x8] sm:$0xff] %vm78, %v334
    %341 = vst.msk [vmem:[%s5 + $0x10] sm:$0xff] %vm78, %v336
    %342 = vst.msk [vmem:[%s5 + $0x18] sm:$0xff] %vm78, %v338
    %s343 = scalar_lea.vmem [#allocation2], 64
    %v344 = vld [vmem:[%s343] sm:$0xff]
    %v345 = vld [vmem:[%s343 + $0x8] sm:$0xff]
    %v346 = vld [vmem:[%s343 + $0x10] sm:$0xff]
    %v347 = vld [vmem:[%s343 + $0x18] sm:$0xff]
    %v348 = vld [vmem:[%s343 + $0x20] sm:$0xff]
    %v349 = vld [vmem:[%s343 + $0x28] sm:$0xff]
    %v350 = vld [vmem:[%s343 + $0x30] sm:$0xff]
    %v351 = vld [vmem:[%s343 + $0x38] sm:$0xff]
    %v352 = vadd.f32 %v344, 0.0
    %v353 = vadd.f32 %v345, 0.0
    %v354 = vadd.f32 %v346, 0.0
    %v355 = vadd.f32 %v347, 0.0
    %v356 = vadd.f32 %v348, 0.0
    %v357 = vadd.f32 %v349, 0.0
    %v358 = vadd.f32 %v350, 0.0
    %v359 = vadd.f32 %v351, 0.0
    %v360 = vadd.f32 %v352, %v353
    %361 = vadd.xlane.f32.xlu0 %v360
    %v362 = vpop.xlane.xlu0 %361
    %v363 = vadd.f32 %v354, %v355
    %364 = vadd.xlane.f32.xlu0 %v363
    %v365 = vpop.xlane.xlu0 %364
    %v366 = vadd.f32 %v356, %v357
    %367 = vadd.xlane.f32.xlu0 %v366
    %v368 = vpop.xlane.xlu0 %367
    %v369 = vadd.f32 %v358, %v359
    %370 = vadd.xlane.f32.xlu0 %v369
    %v371 = vpop.xlane.xlu0 %370
    %v372 = vmax.f32 %v344, %v345
    %373 = vmax.xlane.f32.xlu0 %v372
    %v374 = vpop.xlane.xlu0 %373
    %v375 = vmax.f32 %v346, %v347
    %376 = vmax.xlane.f32.xlu0 %v375
    %v377 = vpop.xlane.xlu0 %376
    %v378 = vmax.f32 %v348, %v349
    %379 = vmax.xlane.f32.xlu0 %v378
    %v380 = vpop.xlane.xlu0 %379
    %v381 = vmax.f32 %v350, %v351
    %382 = vmax.xlane.f32.xlu0 %v381
    %v383 = vpop.xlane.xlu0 %382
    %v384 = vmul.f32 %v362, 0.00390625
    %v385 = vmul.f32 %v365, 0.00390625
    %v386 = vmul.f32 %v368, 0.00390625
    %v387 = vmul.f32 %v371, 0.00390625
    %v388 = vsel %vm78, %v384, %v374
    %v389 = vsel %vm78, %v385, %v377
    %v390 = vsel %vm78, %v386, %v380
    %v391 = vsel %vm78, %v387, %v383
    %v392 = vld [vmem:[%s1] sm:$0x3]
    %v393 = vld [vmem:[%s2] sm:$0x3]
    %395 = vset.pattern.permute.xlu0 0
    %396 = vperm.xlu0 %395, %v393
    %v397 = vpop.permute.xlu0 %396
    %v400 = vsel %vm90, %v392, 0
    %402 = vmatprep.subr.mxu0 0.0
    %403 = vmatpush1.msra.mxu0 0.0
    %404 = vmatprep.subr.mxu0 0.0
    %405 = vmatpush1.msra.mxu0 0.0
    %406 = vmatprep.subr.mxu0 0.0
    %407 = vmatpush1.msra.mxu0 0.0
    %408 = vmatprep.subr.mxu0 0.0
    %409 = vmatpush1.msra.mxu0 0.0
    %410 = vmatprep.subr.mxu0 0.0
    %411 = vmatpush1.msra.mxu0 0.0
    %412 = vmatprep.subr.mxu0 0.0
    %413 = vmatpush1.msra.mxu0 0.0
    %414 = vmatprep.subr.mxu0 0.0
    %415 = vmatpush1.msra.mxu0 0.0
    %416 = vmatprep.subr.mxu0 0.0
    %417 = vmatpush1.msra.mxu0 0.0
    %418 = vmatprep.subr.mxu0 0.0
    %419 = vmatpush1.msra.mxu0 0.0
    %420 = vmatprep.subr.mxu0 0.0
    %421 = vmatpush1.msra.mxu0 0.0
    %422 = vmatprep.subr.mxu0 0.0
    %423 = vmatpush1.msra.mxu0 0.0
    %424 = vmatprep.subr.mxu0 0.0
    %425 = vmatpush1.msra.mxu0 0.0
    %426 = vmatprep.subr.mxu0 0.0
    %427 = vmatpush1.msra.mxu0 %v391
    %428 = vmatprep.subr.mxu0 0.0
    %429 = vmatpush1.msra.mxu0 %v390
    %430 = vmatprep.subr.mxu0 0.0
    %431 = vmatpush1.msra.mxu0 %v389
    %432 = vmatprep.subr.mxu0 0.0
    %433 = vmatpush1.msra.mxu0 %v388
    %434 = vmatprep.subr.mxu0 0.0
    %435 = vmatpush2.msra.mxu0 0.0
    %436 = vmatprep.subr.mxu0 0.0
    %437 = vmatpush2.msra.mxu0 0.0
    %438 = vmatprep.subr.mxu0 0.0
    %439 = vmatpush2.msra.mxu0 0.0
    %440 = vmatprep.subr.mxu0 0.0
    %441 = vmatpush2.msra.mxu0 0.0
    %442 = vmatprep.subr.mxu0 0.0
    %443 = vmatpush2.msra.mxu0 0.0
    %444 = vmatprep.subr.mxu0 0.0
    %445 = vmatpush2.msra.mxu0 0.0
    %446 = vmatprep.subr.mxu0 0.0
    %447 = vmatpush2.msra.mxu0 0.0
    %448 = vmatprep.subr.mxu0 0.0
    %449 = vmatpush2.msra.mxu0 0.0
    %450 = vmatprep.subr.mxu0 0.0
    %451 = vmatpush2.msra.mxu0 0.0
    %452 = vmatprep.subr.mxu0 0.0
    %453 = vmatpush2.msra.mxu0 0.0
    %454 = vmatprep.subr.mxu0 0.0
    %455 = vmatpush2.msra.mxu0 0.0
    %456 = vmatprep.subr.mxu0 0.0
    %457 = vmatpush2.msra.mxu0 0.0
    %458 = vmatprep.subr.mxu0 0.0
    %459 = vmatpush2.msra.mxu0 0.0
    %460 = vmatprep.subr.mxu0 0.0
    %461 = vmatpush2.msra.mxu0 0.0
    %462 = vmatprep.subr.mxu0 0.0
    %463 = vmatpush2.msra.mxu0 0.0
    %464 = vmatprep.subr.mxu0 0.0
    %465 = vmatpush2.msra.mxu0 0.0
    %466 = vmatprep.mubr.f32.mxu0 0.0
    %467 = vmatmul.mubr.f32.gmra.mxu0 %v400
    %v468 = vpop.f32.mrf.mxu0
    %v469 = vadd.f32 %v397, %v468
    %v470 = vpop.f32.mrf.mxu0
    %471 = vdwg.mxu0
    %v472 = vmax.f32 %v469, 0.0
    %v473 = vld [vmem:[%s3] sm:$0xff]
    %v474 = vld [vmem:[%s3 + $0x8] sm:$0xff]
    %v475 = vld [vmem:[%s3 + $0x10] sm:$0xff]
    %v476 = vld [vmem:[%s3 + $0x18] sm:$0xff]
    %v477 = vld [vmem:[%s4] sm:$0xff]
    %v478 = vld [vmem:[%s4 + $0x8] sm:$0xff]
    %v479 = vld [vmem:[%s4 + $0x10] sm:$0xff]
    %v480 = vld [vmem:[%s4 + $0x18] sm:$0xff]
    %482 = vset.pattern.permute.xlu0 0
    %483 = vperm.xlu0 %482, %v477
    %v484 = vpop.permute.xlu0 %483
    %487 = vset.pattern.permute.xlu0 0
    %488 = vperm.xlu0 %487, %v478
    %v489 = vpop.permute.xlu0 %488
    %492 = vset.pattern.permute.xlu0 0
    %493 = vperm.xlu0 %492, %v479
    %v494 = vpop.permute.xlu0 %493
    %497 = vset.pattern.permute.xlu0 0
    %498 = vperm.xlu0 %497, %v480
    %v499 = vpop.permute.xlu0 %498
    %v502 = vsel %vm193, %v473, 0
    %v505 = vsel %vm193, %v474, 0
    %v508 = vsel %vm193, %v475, 0
    %v511 = vsel %vm193, %v476, 0
    %v514 = vsel %vm206, %v472, 0
    %516 = vmatprep.subr.mxu0 0.0
    %517 = vmatpush1.msra.mxu0 0.0
    %518 = vmatprep.subr.mxu0 0.0
    %519 = vmatpush1.msra.mxu0 0.0
    %520 = vmatprep.subr.mxu0 0.0
    %521 = vmatpush1.msra.mxu0 0.0
    %522 = vmatprep.subr.mxu0 0.0
    %523 = vmatpush1.msra.mxu0 0.0
    %524 = vmatprep.subr.mxu0 0.0
    %525 = vmatpush1.msra.mxu0 0.0
    %526 = vmatprep.subr.mxu0 0.0
    %527 = vmatpush1.msra.mxu0 0.0
    %528 = vmatprep.subr.mxu0 0.0
    %529 = vmatpush1.msra.mxu0 0.0
    %530 = vmatprep.subr.mxu0 0.0
    %531 = vmatpush1.msra.mxu0 0.0
    %532 = vmatprep.subr.mxu0 0.0
    %533 = vmatpush1.msra.mxu0 0.0
    %534 = vmatprep.subr.mxu0 0.0
    %535 = vmatpush1.msra.mxu0 0.0
    %536 = vmatprep.subr.mxu0 0.0
    %537 = vmatpush1.msra.mxu0 0.0
    %538 = vmatprep.subr.mxu0 0.0
    %539 = vmatpush1.msra.mxu0 0.0
    %540 = vmatprep.subr.mxu0 0.0
    %541 = vmatpush1.msra.mxu0 0.0
    %542 = vmatprep.subr.mxu0 0.0
    %543 = vmatpush1.msra.mxu0 0.0
    %544 = vmatprep.subr.mxu0 0.0
    %545 = vmatpush1.msra.mxu0 0.0
    %546 = vmatprep.subr.mxu0 0.0
    %547 = vmatpush1.msra.mxu0 %v514
    %548 = vmatprep.subr.mxu0 0.0
    %549 = vmatpush2.msra.mxu0 0.0
    %550 = vmatprep.subr.mxu0 0.0
    %551 = vmatpush2.msra.mxu0 0.0
    %552 = vmatprep.subr.mxu0 0.0
    %553 = vmatpush2.msra.mxu0 0.0
    %554 = vmatprep.subr.mxu0 0.0
    %555 = vmatpush2.msra.mxu0 0.0
    %556 = vmatprep.subr.mxu0 0.0
    %557 = vmatpush2.msra.mxu0 0.0
    %558 = vmatprep.subr.mxu0 0.0
    %559 = vmatpush2.msra.mxu0 0.0
    %560 = vmatprep.subr.mxu0 0.0
    %561 = vmatpush2.msra.mxu0 0.0
    %562 = vmatprep.subr.mxu0 0.0
    %563 = vmatpush2.msra.mxu0 0.0
    %564 = vmatprep.subr.mxu0 0.0
    %565 = vmatpush2.msra.mxu0 0.0
    %566 = vmatprep.subr.mxu0 0.0
    %567 = vmatpush2.msra.mxu0 0.0
    %568 = vmatprep.subr.mxu0 0.0
    %569 = vmatpush2.msra.mxu0 0.0
    %570 = vmatprep.subr.mxu0 0.0
    %571 = vmatpush2.msra.mxu0 0.0
    %572 = vmatprep.subr.mxu0 0.0
    %573 = vmatpush2.msra.mxu0 0.0
    %574 = vmatprep.subr.mxu0 0.0
    %575 = vmatpush2.msra.mxu0 0.0
    %576 = vmatprep.subr.mxu0 0.0
    %577 = vmatpush2.msra.mxu0 0.0
    %578 = vmatprep.subr.mxu0 0.0
    %579 = vmatpush2.msra.mxu0 0.0
    %580 = vmatprep.mubr.f32.mxu0 0.0
    %581 = vmatmul.mubr.f32.gmra.mxu0 %v502
    %v582 = vpop.f32.mrf.mxu0
    %v583 = vadd.f32 %v484, %v582
    %v584 = vpop.f32.mrf.mxu0
    %585 = vmatprep.mubr.f32.mxu0 0.0
    %586 = vmatmul.mubr.f32.gmra.mxu0 %v505
    %v587 = vpop.f32.mrf.mxu0
    %v588 = vadd.f32 %v489, %v587
    %v589 = vpop.f32.mrf.mxu0
    %590 = vmatprep.mubr.f32.mxu0 0.0
    %591 = vmatmul.mubr.f32.gmra.mxu0 %v508
    %v592 = vpop.f32.mrf.mxu0
    %v593 = vadd.f32 %v494, %v592
    %v594 = vpop.f32.mrf.mxu0
    %595 = vmatprep.mubr.f32.mxu0 0.0
    %596 = vmatmul.mubr.f32.gmra.mxu0 %v511
    %v597 = vpop.f32.mrf.mxu0
    %v598 = vadd.f32 %v499, %v597
    %v599 = vpop.f32.mrf.mxu0
    %600 = vdwg.mxu0
    %605 = vrot.lane.b32.xlu0 %v583, 127
    %v606 = vpop.permute.xlu0 %605
    %607 = vrot.lane.b32.xlu0 %v588, 127
    %v608 = vpop.permute.xlu0 %607
    %609 = vrot.lane.b32.xlu0 %v593, 127
    %v610 = vpop.permute.xlu0 %609
    %611 = vrot.lane.b32.xlu0 %v598, 127
    %v612 = vpop.permute.xlu0 %611
    %v617 = vadd.f32 %v583, %v606
    %v618 = vadd.f32 %v588, %v608
    %v619 = vadd.f32 %v593, %v610
    %v620 = vadd.f32 %v598, %v612
    %v621 = vxor.u32 %v617, 2147483648
    %v622 = vxor.u32 %v618, 2147483648
    %v623 = vxor.u32 %v619, 2147483648
    %v624 = vxor.u32 %v620, 2147483648
    %v625 = vmul.f32 %v621, 1.442695
    %v626 = vpow.pop %v625
    %v627 = vmul.f32 %v622, 1.442695
    %v628 = vpow.pop %v627
    %v629 = vmul.f32 %v623, 1.442695
    %v630 = vpow.pop %v629
    %v631 = vmul.f32 %v624, 1.442695
    %v632 = vpow.pop %v631
    %v633 = vadd.f32 %v626, 1.0
    %v634 = vadd.f32 %v628, 1.0
    %v635 = vadd.f32 %v630, 1.0
    %v636 = vadd.f32 %v632, 1.0
    %v637 = vrcp.pop %v633
    %v638 = vmul.f32 1.0, %v637
    %v639 = vrcp.pop %v634
    %v640 = vmul.f32 1.0, %v639
    %v641 = vrcp.pop %v635
    %v642 = vmul.f32 1.0, %v641
    %v643 = vrcp.pop %v636
    %v644 = vmul.f32 1.0, %v643
    %s645 = scalar_lea.vmem %s5, 32
    %646 = vst.msk [vmem:[%s645] sm:$0xff] %vm78, %v638
    %647 = vst.msk [vmem:[%s645 + $0x8] sm:$0xff] %vm78, %v640
    %648 = vst.msk [vmem:[%s645 + $0x10] sm:$0xff] %vm78, %v642
    %649 = vst.msk [vmem:[%s645 + $0x18] sm:$0xff] %vm78, %v644
    // Predicated region
    $region26: #{tpu_custom_call.1} parent=1 // pred_check
      _
    $region27: #{tpu_custom_call.1} parent=1 // pred_check_branch
      %651 = sbr.rel (0) target = $region29
    $region28: #{tpu_custom_call.1} parent=1 // pred_region
      _
    $region29: #{tpu_custom_call.1} parent=1 // pred_fallthru
      _
    // Predicated region
    $region30: #{tpu_custom_call.1} parent=1 // pred_check
      _
    $region31: #{tpu_custom_call.1} parent=1 // pred_check_branch
      %653 = sbr.rel (0) target = $region33
    $region32: #{tpu_custom_call.1} parent=1 // pred_region
      _
    $region33: #{tpu_custom_call.1} parent=1 // pred_fallthru
      _
    %654 = vsyncpa [#allocation3], 1

</llo_original>
